<compile_context>
chip_gen: v7x
topology: tpu7x:2x2x1
jax: 0.10.0
libtpu: 0.0.40
codegen_flags: <defaults>
</compile_context>

<pallas_src>
import functools
import math

import jax
import jax.numpy as jnp
from jax.experimental import pallas as pl
from jax.experimental.pallas import tpu as pltpu


# --------------------------------------------------------------------------- #
# Fused per-episode kernel
# --------------------------------------------------------------------------- #
def _episode_kernel(s_repr_ref, s_y_ref, q_repr_ref, q_y_ref, w0_ref, b0_ref,
                    scal_ref, preds_ref, *, updates, output_lr, proto_maml):
    f32 = jnp.float32
    xs = s_repr_ref[...]                          # (Ns, H) f32
    ys = s_y_ref[...]                             # (Ns, 1) int32
    xq = q_repr_ref[...]                          # (Nq, H) f32
    yq = q_y_ref[...]                             # (Nq, 1) int32
    ns, h = xs.shape
    nq = xq.shape[0]
    c = w0_ref.shape[0]

    # ---- label-dependent tensors hoisted once (reused across all inner steps) ----
    cls_s = jax.lax.broadcasted_iota(jnp.int32, (ns, c), 1)
    onehot_s = (ys == cls_s).astype(f32)          # (Ns, C); y == -1 rows are all-zero
    valid_s = (ys != -1).astype(f32)              # (Ns, 1)
    inv_ns = 1.0 / jnp.maximum(jnp.sum(valid_s), 1.0)

    cls_q = jax.lax.broadcasted_iota(jnp.int32, (nq, c), 1)
    onehot_q = (yq == cls_q).astype(f32)
    valid_q = (yq != -1).astype(f32)
    inv_nq = 1.0 / jnp.maximum(jnp.sum(valid_q), 1.0)

    # ---- proto-MAML init (== _build_prototypes + _initialize_with_proto_weights) ----
    if proto_maml:  # static Python flag
        counts = jnp.sum(onehot_s, axis=0, keepdims=True)                  # (1, C)
        inv_cnt = jnp.where(counts > 0.0, 1.0 / jnp.maximum(counts, 1.0), 0.0)
        # Normalizing the one-hot columns folds the per-class mean divide into the
        # same MXU matmul that builds the class sums (no second 1-wide dot).
        proto = jax.lax.dot_general(onehot_s * inv_cnt, xs,
                                    (((0,), (0,)), ((), ())),
                                    preferred_element_type=f32)            # (C, H)
        init_w = 2.0 * proto
        # -||proto||^2 directly as a (1, C) row (lane-major, no transpose needed)
        init_b = -jax.lax.dot_general(jnp.ones((1, h), f32), proto * proto,
                                      (((1,), (1,)), ((), ())),
                                      preferred_element_type=f32)          # (1, C)
        w = jnp.zeros((c, h), f32)                # reference zeroes the output layer
        bias = jnp.zeros((1, c), f32)
    else:
        init_w = jnp.zeros((c, h), f32)
        init_b = jnp.zeros((1, c), f32)
        w = w0_ref[...]
        bias = b0_ref[...]

    def ce_and_grads(x, onehot, valid, inv_n, w_eff, b_eff):
        # logits = x @ W_eff^T + b_eff   (kept in VMEM, never written to HBM)
        logits = jax.lax.dot_general(x, w_eff, (((1,), (1,)), ((), ())),
                                     preferred_element_type=f32) + b_eff   # (N, C)
        m = jnp.max(logits, axis=-1, keepdims=True)
        z = jnp.exp(logits - m)
        denom = jnp.sum(z, axis=-1, keepdims=True)
        logp = logits - m - jnp.log(denom)
        nll = -jnp.sum(onehot * logp, axis=-1, keepdims=True)              # (N, 1)
        loss = jnp.sum(valid * nll) * inv_n
        p = z * pl.reciprocal(denom, approx=True)                          # EUP path
        dlogits = (valid * inv_n) * (p - onehot)                           # (N, C)
        gw = jax.lax.dot_general(dlogits, x, (((0,), (0,)), ((), ())),
                                 preferred_element_type=f32)               # (C, H)
        gb = jnp.sum(dlogits, axis=0, keepdims=True)                       # (1, C)
        return logits, loss, gw, gb

    # ---- inner loop: SGD on output-layer params only (fully in-kernel) ----
    support_loss = f32(0.0)
    for _ in range(updates):                      # `updates` is a small static int
        _, support_loss, gw, gb = ce_and_grads(xs, onehot_s, valid_s, inv_ns,
                                               w + init_w, bias + init_b)
        w = w - output_lr * gw
        bias = bias - output_lr * gb
    # TODO(synk): diffopt.step(loss) also updates the learner's own parameters
    # (`higher` inner loop); the learner is external to this kernel.

    # ---- query-set evaluation with the adapted output layer ----
    q_logits, query_loss, _, _ = ce_and_grads(xq, onehot_q, valid_q, inv_nq,
                                              w + init_w, bias + init_b)
    mx = jnp.max(q_logits, axis=-1, keepdims=True)
    pred = jnp.min(jnp.where(q_logits == mx, cls_q, c),
                   axis=-1, keepdims=True)                                 # (Nq, 1)
    correct = jnp.sum(jnp.where((yq != -1) & (pred == yq), 1.0, 0.0))
    accuracy = correct * inv_nq

    # ---- outputs: 3 scalars packed into one lane-dense (1,128) store + preds ----
    lane = jax.lax.broadcasted_iota(jnp.int32, (1, 128), 1)
    scal_ref[...] = jnp.where(lane == 0, support_loss,
                    jnp.where(lane == 1, query_loss,
                    jnp.where(lane == 2, accuracy, 0.0)))
    preds_ref[...] = pred


# --------------------------------------------------------------------------- #
# Wrapper: whole meta-batch of episodes in a single pallas_call
# --------------------------------------------------------------------------- #
def seq_meta_episodes(support_repr, support_y, query_repr, query_y, n_classes,
                      *, updates=1, output_lr=0.1, proto_maml=True,
                      key=jax.random.PRNGKey(0)):
    e, ns, h = support_repr.shape
    nq = query_repr.shape[1]
    c = n_classes

    # initialize_output_layer: W, b ~ U(-stdv, stdv), stdv = 1/sqrt(repr_dim)
    # (repr_dim == hidden_size//4 for the RNN learner, == hidden_size otherwise).
    # Dead when proto_maml=True — exactly as in the reference, which overwrites
    # these with zeros in the proto path.
    stdv = 1.0 / math.sqrt(h)
    kw, kb = jax.random.split(key)
    w0 = jax.random.uniform(kw, (e, c, h), jnp.float32, -stdv, stdv)
    b0 = jax.random.uniform(kb, (e, 1, c), jnp.float32, -stdv, stdv)

    kernel = functools.partial(_episode_kernel, updates=updates,
                               output_lr=output_lr, proto_maml=proto_maml)

    scal, preds = pl.pallas_call(
        kernel,
        out_shape=(jax.ShapeDtypeStruct((e, 1, 128), jnp.float32),
                   jax.ShapeDtypeStruct((e, nq, 1), jnp.int32)),
        grid=(e,),
        in_specs=[
            pl.BlockSpec((None, ns, h), lambda i: (i, 0, 0)),
            pl.BlockSpec((None, ns, 1), lambda i: (i, 0, 0)),
            pl.BlockSpec((None, nq, h), lambda i: (i, 0, 0)),
            pl.BlockSpec((None, nq, 1), lambda i: (i, 0, 0)),
            pl.BlockSpec((None, c, h), lambda i: (i, 0, 0)),
            pl.BlockSpec((None, 1, c), lambda i: (i, 0, 0)),
        ],
        out_specs=(
            pl.BlockSpec((None, 1, 128), lambda i: (i, 0, 0)),
            pl.BlockSpec((None, nq, 1), lambda i: (i, 0, 0)),
        ),
        compiler_params=pltpu.CompilerParams(
            dimension_semantics=("parallel",)),   # episodes across TCs (v7x megacore)
    )(support_repr, support_y[..., None], query_repr, query_y[..., None], w0, b0)

    support_loss = scal[:, 0, 0]
    query_loss = scal[:, 0, 1]
    accuracy = scal[:, 0, 2]
    return support_loss, query_loss, accuracy, preds[:, :, 0]


# --------------------------------------------------------------------------- #
if __name__ == "__main__":
    key = jax.random.PRNGKey(0)
    k1, k2, k3, k4, k5 = jax.random.split(key, 5)

    E, B, T, H, C = 2, 2, 8, 32, 4      # episodes, batch, seq len, repr dim, classes
    N = B * T                           # tokens per episode (flattened B*T)

    support_repr = jax.random.normal(k1, (E, N, H), jnp.float32)
    support_y = jax.random.randint(k2, (E, N), 0, C, dtype=jnp.int32)
    support_y = support_y.at[0, -1].set(-1)        # padding labels (ignore_index=-1)

    query_repr = jax.random.normal(k3, (E, N, H), jnp.float32)
    query_y = jax.random.randint(k4, (E, N), 0, C, dtype=jnp.int32)
    query_y = query_y.at[1, -2:].set(-1)

    run = jax.jit(lambda sr, sy, qr, qy: seq_meta_episodes(
        sr, sy, qr, qy, C, updates=1, output_lr=0.1, proto_maml=True, key=k5))

    s_loss, q_loss, acc, preds = run(support_repr, support_y, query_repr, query_y)
    jax.block_until_ready((s_loss, q_loss, acc, preds))

    assert bool(jnp.all(jnp.isfinite(s_loss))) and bool(jnp.all(jnp.isfinite(q_loss)))
    assert bool(jnp.all((preds >= 0) & (preds < C)))
    print("KERNEL_OK")
</pallas_src>

<mosaic_0001>
module attributes {stable_mosaic.version = 11 : i64} {
  func.func @_episode_kernel(%arg0: i32, %arg1: memref<1x16x32xf32, #tpu.memory_space<vmem>>, %arg2: memref<1x16x1xi32, #tpu.memory_space<vmem>>, %arg3: memref<1x16x32xf32, #tpu.memory_space<vmem>>, %arg4: memref<1x16x1xi32, #tpu.memory_space<vmem>>, %arg5: memref<1x4x32xf32, #tpu.memory_space<vmem>>, %arg6: memref<1x1x4xf32, #tpu.memory_space<vmem>>, %arg7: memref<1x1x128xf32, #tpu.memory_space<vmem>>, %arg8: memref<1x16x1xi32, #tpu.memory_space<vmem>>) attributes {dimension_semantics = [#tpu.dimension_semantics<parallel>], iteration_bounds = array<i64: 2>, scalar_prefetch = 0 : i64, scratch_operands = 0 : i64, tpu.core_type = #tpu.core_type<tc>, window_params = [{transform_indices = @transform_0, window_bounds = array<i64: 1, 16, 32>}, {transform_indices = @transform_1, window_bounds = array<i64: 1, 16, 1>}, {transform_indices = @transform_2, window_bounds = array<i64: 1, 16, 32>}, {transform_indices = @transform_3, window_bounds = array<i64: 1, 16, 1>}, {transform_indices = @transform_4, window_bounds = array<i64: 1, 4, 32>}, {transform_indices = @transform_5, window_bounds = array<i64: 1, 1, 4>}, {transform_indices = @transform_6, window_bounds = array<i64: 1, 1, 128>}, {transform_indices = @transform_7, window_bounds = array<i64: 1, 16, 1>}]} {
    %c0 = arith.constant 0 : index
    %c0_0 = arith.constant 0 : index
    %c0_1 = arith.constant 0 : index
    %0 = vector.load %arg1[%c0, %c0_0, %c0_1] : memref<1x16x32xf32, #tpu.memory_space<vmem>>, vector<1x16x32xf32>
    %1 = vector.shape_cast %0 : vector<1x16x32xf32> to vector<16x32xf32>
    %c0_2 = arith.constant 0 : index
    %c0_3 = arith.constant 0 : index
    %c0_4 = arith.constant 0 : index
    %2 = vector.load %arg2[%c0_2, %c0_3, %c0_4] : memref<1x16x1xi32, #tpu.memory_space<vmem>>, vector<1x16x1xi32>
    %3 = vector.shape_cast %2 : vector<1x16x1xi32> to vector<16x1xi32>
    %c0_5 = arith.constant 0 : index
    %c0_6 = arith.constant 0 : index
    %c0_7 = arith.constant 0 : index
    %4 = vector.load %arg3[%c0_5, %c0_6, %c0_7] : memref<1x16x32xf32, #tpu.memory_space<vmem>>, vector<1x16x32xf32>
    %5 = vector.shape_cast %4 : vector<1x16x32xf32> to vector<16x32xf32>
    %c0_8 = arith.constant 0 : index
    %c0_9 = arith.constant 0 : index
    %c0_10 = arith.constant 0 : index
    %6 = vector.load %arg4[%c0_8, %c0_9, %c0_10] : memref<1x16x1xi32, #tpu.memory_space<vmem>>, vector<1x16x1xi32>
    %7 = vector.shape_cast %6 : vector<1x16x1xi32> to vector<16x1xi32>
    %8 = tpu.iota {dimensions = array<i32: 1>} : vector<16x4xi32>
    %9 = vector.broadcast %3 : vector<16x1xi32> to vector<16x4xi32>
    %10 = arith.cmpi eq, %9, %8 : vector<16x4xi32>
    %11 = arith.extui %10 : vector<16x4xi1> to vector<16x4xi32>
    %12 = arith.sitofp %11 : vector<16x4xi32> to vector<16x4xf32>
    %c-1_i32 = arith.constant -1 : i32
    %13 = vector.broadcast %c-1_i32 : i32 to vector<16x1xi32>
    %14 = arith.cmpi ne, %3, %13 : vector<16x1xi32>
    %15 = arith.extui %14 : vector<16x1xi1> to vector<16x1xi32>
    %16 = arith.sitofp %15 : vector<16x1xi32> to vector<16x1xf32>
    %17 = vector.shape_cast %16 : vector<16x1xf32> to vector<1x16x1xf32>
    %cst = arith.constant dense<0.000000e+00> : vector<1xf32>
    %18 = vector.multi_reduction <add>, %17, %cst [1, 2] : vector<1x16x1xf32> to vector<1xf32>
    %19 = vector.shape_cast %18 : vector<1xf32> to vector<1x1x1xf32>
    %20 = vector.extract %19[0, 0, 0] : f32 from vector<1x1x1xf32>
    %cst_11 = arith.constant 1.000000e+00 : f32
    %21 = arith.maximumf %20, %cst_11 : f32
    %cst_12 = arith.constant 1.000000e+00 : f32
    %22 = arith.divf %cst_12, %21 : f32
    %23 = tpu.iota {dimensions = array<i32: 1>} : vector<16x4xi32>
    %24 = vector.broadcast %7 : vector<16x1xi32> to vector<16x4xi32>
    %25 = arith.cmpi eq, %24, %23 : vector<16x4xi32>
    %26 = arith.extui %25 : vector<16x4xi1> to vector<16x4xi32>
    %27 = arith.sitofp %26 : vector<16x4xi32> to vector<16x4xf32>
    %c-1_i32_13 = arith.constant -1 : i32
    %28 = vector.broadcast %c-1_i32_13 : i32 to vector<16x1xi32>
    %29 = arith.cmpi ne, %7, %28 : vector<16x1xi32>
    %30 = arith.extui %29 : vector<16x1xi1> to vector<16x1xi32>
    %31 = arith.sitofp %30 : vector<16x1xi32> to vector<16x1xf32>
    %32 = vector.shape_cast %31 : vector<16x1xf32> to vector<1x16x1xf32>
    %cst_14 = arith.constant dense<0.000000e+00> : vector<1xf32>
    %33 = vector.multi_reduction <add>, %32, %cst_14 [1, 2] : vector<1x16x1xf32> to vector<1xf32>
    %34 = vector.shape_cast %33 : vector<1xf32> to vector<1x1x1xf32>
    %35 = vector.extract %34[0, 0, 0] : f32 from vector<1x1x1xf32>
    %cst_15 = arith.constant 1.000000e+00 : f32
    %36 = arith.maximumf %35, %cst_15 : f32
    %cst_16 = arith.constant 1.000000e+00 : f32
    %37 = arith.divf %cst_16, %36 : f32
    %cst_17 = arith.constant dense<0.000000e+00> : vector<4xf32>
    %38 = vector.multi_reduction <add>, %12, %cst_17 [0] : vector<16x4xf32> to vector<4xf32>
    %39 = vector.shape_cast %38 : vector<4xf32> to vector<1x4xf32>
    %cst_18 = arith.constant 0.000000e+00 : f32
    %40 = vector.broadcast %cst_18 : f32 to vector<1x4xf32>
    %41 = arith.cmpf ogt, %39, %40 : vector<1x4xf32>
    %cst_19 = arith.constant 1.000000e+00 : f32
    %42 = vector.broadcast %cst_19 : f32 to vector<1x4xf32>
    %43 = arith.maximumf %39, %42 : vector<1x4xf32>
    %cst_20 = arith.constant 1.000000e+00 : f32
    %44 = vector.broadcast %cst_20 : f32 to vector<1x4xf32>
    %45 = arith.divf %44, %43 : vector<1x4xf32>
    %cst_21 = arith.constant 0.000000e+00 : f32
    %46 = vector.broadcast %cst_21 : f32 to vector<1x4xf32>
    %47 = arith.select %41, %45, %46 : vector<1x4xi1>, vector<1x4xf32>
    %48 = vector.broadcast %47 : vector<1x4xf32> to vector<16x4xf32>
    %49 = arith.mulf %12, %48 : vector<16x4xf32>
    %cst_22 = arith.constant dense<0.000000e+00> : vector<4x32xf32>
    %50 = tpu.matmul %49, %1, %cst_22 {dimension_numbers = #tpu.dot_dimension_numbers<[0], [0], [1], [1], [0, 1, 1, 1], [], []>} : vector<16x4xf32>, vector<16x32xf32>, vector<4x32xf32> -> vector<4x32xf32>
    %cst_23 = arith.constant 2.000000e+00 : f32
    %51 = vector.broadcast %cst_23 : f32 to vector<4x32xf32>
    %52 = arith.mulf %51, %50 : vector<4x32xf32>
    %cst_24 = arith.constant 1.000000e+00 : f32
    %53 = vector.broadcast %cst_24 : f32 to vector<1x32xf32>
    %54 = arith.mulf %50, %50 : vector<4x32xf32>
    %cst_25 = arith.constant dense<0.000000e+00> : vector<1x4xf32>
    %55 = tpu.matmul %53, %54, %cst_25 {dimension_numbers = #tpu.dot_dimension_numbers<[1], [1], [0], [0], [0, 0, 1, 0], [], []>} : vector<1x32xf32>, vector<4x32xf32>, vector<1x4xf32> -> vector<1x4xf32>
    %cst_26 = arith.constant 0.000000e+00 : f32
    %56 = vector.broadcast %cst_26 : f32 to vector<1x4xf32>
    %57 = arith.subf %56, %55 : vector<1x4xf32>
    %cst_27 = arith.constant 0.000000e+00 : f32
    %58 = vector.broadcast %cst_27 : f32 to vector<4x32xf32>
    %cst_28 = arith.constant 0.000000e+00 : f32
    %59 = vector.broadcast %cst_28 : f32 to vector<1x4xf32>
    %60 = arith.addf %58, %52 : vector<4x32xf32>
    %61 = arith.addf %59, %57 : vector<1x4xf32>
    %cst_29 = arith.constant dense<0.000000e+00> : vector<16x4xf32>
    %62 = tpu.matmul %1, %60, %cst_29 {dimension_numbers = #tpu.dot_dimension_numbers<[1], [1], [0], [0], [0, 0, 1, 0], [], []>} : vector<16x32xf32>, vector<4x32xf32>, vector<16x4xf32> -> vector<16x4xf32>
    %63 = vector.broadcast %61 : vector<1x4xf32> to vector<16x4xf32>
    %64 = arith.addf %62, %63 : vector<16x4xf32>
    %cst_30 = arith.constant dense<0xFF800000> : vector<16xf32>
    %65 = vector.multi_reduction <maximumf>, %64, %cst_30 [1] : vector<16x4xf32> to vector<16xf32>
    %66 = vector.shape_cast %65 : vector<16xf32> to vector<16x1xf32>
    %67 = vector.broadcast %66 : vector<16x1xf32> to vector<16x4xf32>
    %68 = arith.subf %64, %67 : vector<16x4xf32>
    %69 = math.exp %68 : vector<16x4xf32>
    %cst_31 = arith.constant dense<0.000000e+00> : vector<16xf32>
    %70 = vector.multi_reduction <add>, %69, %cst_31 [1] : vector<16x4xf32> to vector<16xf32>
    %71 = vector.shape_cast %70 : vector<16xf32> to vector<16x1xf32>
    %72 = vector.broadcast %66 : vector<16x1xf32> to vector<16x4xf32>
    %73 = arith.subf %64, %72 : vector<16x4xf32>
    %74 = math.log %71 : vector<16x1xf32>
    %75 = vector.broadcast %74 : vector<16x1xf32> to vector<16x4xf32>
    %76 = arith.subf %73, %75 : vector<16x4xf32>
    %77 = arith.mulf %12, %76 : vector<16x4xf32>
    %cst_32 = arith.constant dense<0.000000e+00> : vector<16xf32>
    %78 = vector.multi_reduction <add>, %77, %cst_32 [1] : vector<16x4xf32> to vector<16xf32>
    %79 = vector.shape_cast %78 : vector<16xf32> to vector<16x1xf32>
    %cst_33 = arith.constant 0.000000e+00 : f32
    %80 = vector.broadcast %cst_33 : f32 to vector<16x1xf32>
    %81 = arith.subf %80, %79 : vector<16x1xf32>
    %82 = arith.mulf %16, %81 : vector<16x1xf32>
    %83 = vector.shape_cast %82 : vector<16x1xf32> to vector<1x16x1xf32>
    %cst_34 = arith.constant dense<0.000000e+00> : vector<1xf32>
    %84 = vector.multi_reduction <add>, %83, %cst_34 [1, 2] : vector<1x16x1xf32> to vector<1xf32>
    %85 = vector.shape_cast %84 : vector<1xf32> to vector<1x1x1xf32>
    %86 = vector.extract %85[0, 0, 0] : f32 from vector<1x1x1xf32>
    %87 = arith.mulf %86, %22 : f32
    %88 = tpu.reciprocal %71 {approx = true} : vector<16x1xf32> -> vector<16x1xf32>
    %89 = vector.broadcast %88 : vector<16x1xf32> to vector<16x4xf32>
    %90 = arith.mulf %69, %89 : vector<16x4xf32>
    %91 = vector.broadcast %22 : f32 to vector<16x1xf32>
    %92 = arith.mulf %16, %91 : vector<16x1xf32>
    %93 = arith.subf %90, %12 : vector<16x4xf32>
    %94 = vector.broadcast %92 : vector<16x1xf32> to vector<16x4xf32>
    %95 = arith.mulf %94, %93 : vector<16x4xf32>
    %cst_35 = arith.constant dense<0.000000e+00> : vector<4x32xf32>
    %96 = tpu.matmul %95, %1, %cst_35 {dimension_numbers = #tpu.dot_dimension_numbers<[0], [0], [1], [1], [0, 1, 1, 1], [], []>} : vector<16x4xf32>, vector<16x32xf32>, vector<4x32xf32> -> vector<4x32xf32>
    %cst_36 = arith.constant dense<0.000000e+00> : vector<4xf32>
    %97 = vector.multi_reduction <add>, %95, %cst_36 [0] : vector<16x4xf32> to vector<4xf32>
    %98 = vector.shape_cast %97 : vector<4xf32> to vector<1x4xf32>
    %cst_37 = arith.constant 1.000000e-01 : f32
    %99 = vector.broadcast %cst_37 : f32 to vector<4x32xf32>
    %100 = arith.mulf %99, %96 : vector<4x32xf32>
    %101 = arith.subf %58, %100 : vector<4x32xf32>
    %cst_38 = arith.constant 1.000000e-01 : f32
    %102 = vector.broadcast %cst_38 : f32 to vector<1x4xf32>
    %103 = arith.mulf %102, %98 : vector<1x4xf32>
    %104 = arith.subf %59, %103 : vector<1x4xf32>
    %105 = arith.addf %101, %52 : vector<4x32xf32>
    %106 = arith.addf %104, %57 : vector<1x4xf32>
    %cst_39 = arith.constant dense<0.000000e+00> : vector<16x4xf32>
    %107 = tpu.matmul %5, %105, %cst_39 {dimension_numbers = #tpu.dot_dimension_numbers<[1], [1], [0], [0], [0, 0, 1, 0], [], []>} : vector<16x32xf32>, vector<4x32xf32>, vector<16x4xf32> -> vector<16x4xf32>
    %108 = vector.broadcast %106 : vector<1x4xf32> to vector<16x4xf32>
    %109 = arith.addf %107, %108 : vector<16x4xf32>
    %cst_40 = arith.constant dense<0xFF800000> : vector<16xf32>
    %110 = vector.multi_reduction <maximumf>, %109, %cst_40 [1] : vector<16x4xf32> to vector<16xf32>
    %111 = vector.shape_cast %110 : vector<16xf32> to vector<16x1xf32>
    %112 = vector.broadcast %111 : vector<16x1xf32> to vector<16x4xf32>
    %113 = arith.subf %109, %112 : vector<16x4xf32>
    %114 = math.exp %113 : vector<16x4xf32>
    %cst_41 = arith.constant dense<0.000000e+00> : vector<16xf32>
    %115 = vector.multi_reduction <add>, %114, %cst_41 [1] : vector<16x4xf32> to vector<16xf32>
    %116 = vector.shape_cast %115 : vector<16xf32> to vector<16x1xf32>
    %117 = vector.broadcast %111 : vector<16x1xf32> to vector<16x4xf32>
    %118 = arith.subf %109, %117 : vector<16x4xf32>
    %119 = math.log %116 : vector<16x1xf32>
    %120 = vector.broadcast %119 : vector<16x1xf32> to vector<16x4xf32>
    %121 = arith.subf %118, %120 : vector<16x4xf32>
    %122 = arith.mulf %27, %121 : vector<16x4xf32>
    %cst_42 = arith.constant dense<0.000000e+00> : vector<16xf32>
    %123 = vector.multi_reduction <add>, %122, %cst_42 [1] : vector<16x4xf32> to vector<16xf32>
    %124 = vector.shape_cast %123 : vector<16xf32> to vector<16x1xf32>
    %cst_43 = arith.constant 0.000000e+00 : f32
    %125 = vector.broadcast %cst_43 : f32 to vector<16x1xf32>
    %126 = arith.subf %125, %124 : vector<16x1xf32>
    %127 = arith.mulf %31, %126 : vector<16x1xf32>
    %128 = vector.shape_cast %127 : vector<16x1xf32> to vector<1x16x1xf32>
    %cst_44 = arith.constant dense<0.000000e+00> : vector<1xf32>
    %129 = vector.multi_reduction <add>, %128, %cst_44 [1, 2] : vector<1x16x1xf32> to vector<1xf32>
    %130 = vector.shape_cast %129 : vector<1xf32> to vector<1x1x1xf32>
    %131 = vector.extract %130[0, 0, 0] : f32 from vector<1x1x1xf32>
    %132 = arith.mulf %131, %37 : f32
    %cst_45 = arith.constant dense<0xFF800000> : vector<16xf32>
    %133 = vector.multi_reduction <maximumf>, %109, %cst_45 [1] : vector<16x4xf32> to vector<16xf32>
    %134 = vector.shape_cast %133 : vector<16xf32> to vector<16x1xf32>
    %135 = vector.broadcast %134 : vector<16x1xf32> to vector<16x4xf32>
    %136 = arith.cmpf oeq, %109, %135 : vector<16x4xf32>
    %c4_i32 = arith.constant 4 : i32
    %137 = vector.broadcast %c4_i32 : i32 to vector<16x4xi32>
    %138 = arith.select %136, %23, %137 : vector<16x4xi1>, vector<16x4xi32>
    %cst_46 = arith.constant dense<2147483647> : vector<16xi32>
    %139 = vector.multi_reduction <minsi>, %138, %cst_46 [1] : vector<16x4xi32> to vector<16xi32>
    %140 = vector.shape_cast %139 : vector<16xi32> to vector<16x1xi32>
    %c-1_i32_47 = arith.constant -1 : i32
    %141 = vector.broadcast %c-1_i32_47 : i32 to vector<16x1xi32>
    %142 = arith.cmpi ne, %7, %141 : vector<16x1xi32>
    %143 = arith.cmpi eq, %140, %7 : vector<16x1xi32>
    %144 = arith.andi %142, %143 : vector<16x1xi1>
    %cst_48 = arith.constant 1.000000e+00 : f32
    %cst_49 = arith.constant 0.000000e+00 : f32
    %145 = vector.broadcast %cst_48 : f32 to vector<16x1xf32>
    %146 = vector.broadcast %cst_49 : f32 to vector<16x1xf32>
    %147 = arith.select %144, %145, %146 : vector<16x1xi1>, vector<16x1xf32>
    %148 = vector.shape_cast %147 : vector<16x1xf32> to vector<1x16x1xf32>
    %cst_50 = arith.constant dense<0.000000e+00> : vector<1xf32>
    %149 = vector.multi_reduction <add>, %148, %cst_50 [1, 2] : vector<1x16x1xf32> to vector<1xf32>
    %150 = vector.shape_cast %149 : vector<1xf32> to vector<1x1x1xf32>
    %151 = vector.extract %150[0, 0, 0] : f32 from vector<1x1x1xf32>
    %152 = arith.mulf %151, %37 : f32
    %153 = tpu.iota {dimensions = array<i32: 1>} : vector<1x128xi32>
    %c0_i32 = arith.constant 0 : i32
    %154 = vector.broadcast %c0_i32 : i32 to vector<1x128xi32>
    %155 = arith.cmpi eq, %153, %154 : vector<1x128xi32>
    %c1_i32 = arith.constant 1 : i32
    %156 = vector.broadcast %c1_i32 : i32 to vector<1x128xi32>
    %157 = arith.cmpi eq, %153, %156 : vector<1x128xi32>
    %c2_i32 = arith.constant 2 : i32
    %158 = vector.broadcast %c2_i32 : i32 to vector<1x128xi32>
    %159 = arith.cmpi eq, %153, %158 : vector<1x128xi32>
    %cst_51 = arith.constant 0.000000e+00 : f32
    %160 = vector.broadcast %152 : f32 to vector<1x128xf32>
    %161 = vector.broadcast %cst_51 : f32 to vector<1x128xf32>
    %162 = arith.select %159, %160, %161 : vector<1x128xi1>, vector<1x128xf32>
    %163 = vector.broadcast %132 : f32 to vector<1x128xf32>
    %164 = arith.select %157, %163, %162 : vector<1x128xi1>, vector<1x128xf32>
    %165 = vector.broadcast %87 : f32 to vector<1x128xf32>
    %166 = arith.select %155, %165, %164 : vector<1x128xi1>, vector<1x128xf32>
    %c0_52 = arith.constant 0 : index
    %c0_53 = arith.constant 0 : index
    %c0_54 = arith.constant 0 : index
    %167 = vector.load %arg7[%c0_52, %c0_53, %c0_54] : memref<1x1x128xf32, #tpu.memory_space<vmem>>, vector<1x1x128xf32>
    %168 = vector.shape_cast %167 : vector<1x1x128xf32> to vector<1x128xf32>
    %169 = vector.shape_cast %166 : vector<1x128xf32> to vector<1x1x128xf32>
    tpu.vector_store %arg7[%c0_52, %c0_53, %c0_54], %169 {strides = array<i32>} : memref<1x1x128xf32, #tpu.memory_space<vmem>>, vector<1x1x128xf32>,
    %c0_55 = arith.constant 0 : index
    %c0_56 = arith.constant 0 : index
    %c0_57 = arith.constant 0 : index
    %170 = vector.load %arg8[%c0_55, %c0_56, %c0_57] : memref<1x16x1xi32, #tpu.memory_space<vmem>>, vector<1x16x1xi32>
    %171 = vector.shape_cast %170 : vector<1x16x1xi32> to vector<16x1xi32>
    %172 = vector.shape_cast %140 : vector<16x1xi32> to vector<1x16x1xi32>
    tpu.vector_store %arg8[%c0_55, %c0_56, %c0_57], %172 {strides = array<i32>} : memref<1x16x1xi32, #tpu.memory_space<vmem>>, vector<1x16x1xi32>,
    return
  }
  func.func @transform_0(%arg0: i32) -> (i32, i32, i32) {
    %c0_i32 = arith.constant 0 : i32
    %c0_i32_0 = arith.constant 0 : i32
    %c0_i32_1 = arith.constant 0 : i32
    return %arg0, %c0_i32, %c0_i32_0 : i32, i32, i32
  }
  func.func @transform_1(%arg0: i32) -> (i32, i32, i32) {
    %c0_i32 = arith.constant 0 : i32
    %c0_i32_0 = arith.constant 0 : i32
    %c0_i32_1 = arith.constant 0 : i32
    return %arg0, %c0_i32, %c0_i32_0 : i32, i32, i32
  }
  func.func @transform_2(%arg0: i32) -> (i32, i32, i32) {
    %c0_i32 = arith.constant 0 : i32
    %c0_i32_0 = arith.constant 0 : i32
    %c0_i32_1 = arith.constant 0 : i32
    return %arg0, %c0_i32, %c0_i32_0 : i32, i32, i32
  }
  func.func @transform_3(%arg0: i32) -> (i32, i32, i32) {
    %c0_i32 = arith.constant 0 : i32
    %c0_i32_0 = arith.constant 0 : i32
    %c0_i32_1 = arith.constant 0 : i32
    return %arg0, %c0_i32, %c0_i32_0 : i32, i32, i32
  }
  func.func @transform_4(%arg0: i32) -> (i32, i32, i32) {
    %c0_i32 = arith.constant 0 : i32
    %c0_i32_0 = arith.constant 0 : i32
    %c0_i32_1 = arith.constant 0 : i32
    return %arg0, %c0_i32, %c0_i32_0 : i32, i32, i32
  }
  func.func @transform_5(%arg0: i32) -> (i32, i32, i32) {
    %c0_i32 = arith.constant 0 : i32
    %c0_i32_0 = arith.constant 0 : i32
    %c0_i32_1 = arith.constant 0 : i32
    return %arg0, %c0_i32, %c0_i32_0 : i32, i32, i32
  }
  func.func @transform_6(%arg0: i32) -> (i32, i32, i32) {
    %c0_i32 = arith.constant 0 : i32
    %c0_i32_0 = arith.constant 0 : i32
    %c0_i32_1 = arith.constant 0 : i32
    return %arg0, %c0_i32, %c0_i32_0 : i32, i32, i32
  }
  func.func @transform_7(%arg0: i32) -> (i32, i32, i32) {
    %c0_i32 = arith.constant 0 : i32
    %c0_i32_0 = arith.constant 0 : i32
    %c0_i32_1 = arith.constant 0 : i32
    return %arg0, %c0_i32, %c0_i32_0 : i32, i32, i32
  }
}

</mosaic_0001>

<llo_original>
// kernel: _lambda_.1
$region0: #{_lambda_.1}
  #allocation0 [shape = 'u32[]', space=smem, size = 0x4, offset = 0x4, fixed_abs, tag = 'smem constant byte address 0x4 - core index']
  #allocation1 [shape = 'u32[144,128]{1,0:T(1,128)}', space=vmem, size = 0x12000, scoped, tag = 'internal scratch']
  %s0 = inlined_call_operand.vmem [shape: f32[2,16,32], index: 0, kind: input, shape index: {}]
  %s1 = inlined_call_operand.vmem [shape: s32[2,16,1], index: 1, kind: input, shape index: {}]
  %s2 = inlined_call_operand.vmem [shape: f32[2,16,32], index: 2, kind: input, shape index: {}]
  %s3 = inlined_call_operand.vmem [shape: s32[2,16,1], index: 3, kind: input, shape index: {}]
  %s4 = inlined_call_operand.vmem [shape: f32[2,4,32], index: 4, kind: input, shape index: {}]
  %s5 = inlined_call_operand.vmem [shape: f32[2,1,4], index: 5, kind: input, shape index: {}]
  %s6 = inlined_call_operand.vmem [shape: f32[2,1,128], index: 6, kind: output, shape index: {0}]
  %s7 = inlined_call_operand.vmem [shape: s32[2,16,1], index: 7, kind: output, shape index: {1}]
  %8 = xla_tuple %s6, %s7
  %s9 = sld [smem:[#allocation0]]
  $region65: #{_lambda_.1} parent=0
    _
  %s11 = ssub.s32 1, %s9
  %s12 = scalar_select 0, %s11, %s9
  loop: start=0, step=1, limit=4
  $region2: #{_lambda_.1} parent=0 // loop_pre_header
    _
  $region3: #{_lambda_.1} parent=0 // loop_header
    %s14 = sphi 0, %s18
    %p15 = scmp.ge.s32.totalorder %s14, 4
    %s24 = sphi 0, %s26
    %s27 = sphi 0, %s24
    %s28 = sphi 0, %s27
    %s44 = sphi 0, %s28
    %s50 = sphi 0, %s52
    %s53 = sphi 0, %s50
    %s54 = sphi 0, %s53
    %s70 = sphi 0, %s54
    %s76 = sphi 0, %s78
    %s79 = sphi 0, %s76
    %s80 = sphi 0, %s79
    %s96 = sphi 0, %s80
    %s102 = sphi 0, %s104
    %s105 = sphi 0, %s102
    %s106 = sphi 0, %s105
    %s122 = sphi 0, %s106
    %s128 = sphi 0, %s130
    %s131 = sphi 0, %s128
    %s132 = sphi 0, %s131
    %s148 = sphi 0, %s132
    %s154 = sphi 0, %s156
    %s157 = sphi 0, %s154
    %s158 = sphi 0, %s157
    %s174 = sphi 0, %s158
    %s180 = sphi 0, %s182
    %s183 = sphi 0, %s180
    %s184 = sphi 0, %s183
    %s200 = sphi 0, %s184
    %s206 = sphi 0, %s208
    %s209 = sphi 0, %s206
    %s210 = sphi 0, %s209
    %s226 = sphi 0, %s210
  $region4: #{_lambda_.1} parent=0 // loop_header_branch
    %17 = sbr.rel (%p15) target = $region8
  $region5: #{_lambda_.1} parent=0 // loop_body
    %s19 = ssub.s32 %s14, 1
    %s20 = ssub.s32 %s14, 2
    %s21 = sadd.s32 %s14, 1
    %s22 = ssub.s32 %s14, %s21
    %p23 = scmp.eq.s32.totalorder %s22, 0
    %s25 = sadd.s32 %s24, 1
    %s26 = scalar_select %p23, %s24, %s25
    %p29 = pneg %p23
    %p30 = scmp.eq.s32.totalorder %s14, 1
    %p31 = por %p29, %p30
    %p32 = scmp.ne.s32.totalorder %s24, %s27
    %p33 = scmp.eq.s32.totalorder %s14, 0
    %p34 = por %p32, %p33
    %p35 = scmp.ne.s32.totalorder %s24, %s27
    %p36 = scmp.eq.s32.totalorder %s19, 1
    %p37 = por %p35, %p36
    %p38 = scmp.ne.s32.totalorder %s27, %s28
    %p39 = scmp.eq.s32.totalorder %s19, 0
    %p40 = por %p38, %p39
    %p41 = scmp.ne.s32.totalorder %s27, %s28
    %p42 = scmp.eq.s32.totalorder %s20, 1
    %p43 = por %p41, %p42
    %p45 = scmp.ne.s32.totalorder %s28, %s44
    %p46 = scmp.eq.s32.totalorder %s20, 0
    %p47 = por %p45, %p46
    %s48 = ssub.s32 %s14, %s21
    %p49 = scmp.eq.s32.totalorder %s48, 0
    %s51 = sadd.s32 %s50, 1
    %s52 = scalar_select %p49, %s50, %s51
    %p55 = pneg %p49
    %p56 = scmp.eq.s32.totalorder %s14, 1
    %p57 = por %p55, %p56
    %p58 = scmp.ne.s32.totalorder %s50, %s53
    %p59 = scmp.eq.s32.totalorder %s14, 0
    %p60 = por %p58, %p59
    %p61 = scmp.ne.s32.totalorder %s50, %s53
    %p62 = scmp.eq.s32.totalorder %s19, 1
    %p63 = por %p61, %p62
    %p64 = scmp.ne.s32.totalorder %s53, %s54
    %p65 = scmp.eq.s32.totalorder %s19, 0
    %p66 = por %p64, %p65
    %p67 = scmp.ne.s32.totalorder %s53, %s54
    %p68 = scmp.eq.s32.totalorder %s20, 1
    %p69 = por %p67, %p68
    %p71 = scmp.ne.s32.totalorder %s54, %s70
    %p72 = scmp.eq.s32.totalorder %s20, 0
    %p73 = por %p71, %p72
    %s74 = ssub.s32 %s14, %s21
    %p75 = scmp.eq.s32.totalorder %s74, 0
    %s77 = sadd.s32 %s76, 1
    %s78 = scalar_select %p75, %s76, %s77
    %p81 = pneg %p75
    %p82 = scmp.eq.s32.totalorder %s14, 1
    %p83 = por %p81, %p82
    %p84 = scmp.ne.s32.totalorder %s76, %s79
    %p85 = scmp.eq.s32.totalorder %s14, 0
    %p86 = por %p84, %p85
    %p87 = scmp.ne.s32.totalorder %s76, %s79
    %p88 = scmp.eq.s32.totalorder %s19, 1
    %p89 = por %p87, %p88
    %p90 = scmp.ne.s32.totalorder %s79, %s80
    %p91 = scmp.eq.s32.totalorder %s19, 0
    %p92 = por %p90, %p91
    %p93 = scmp.ne.s32.totalorder %s79, %s80
    %p94 = scmp.eq.s32.totalorder %s20, 1
    %p95 = por %p93, %p94
    %p97 = scmp.ne.s32.totalorder %s80, %s96
    %p98 = scmp.eq.s32.totalorder %s20, 0
    %p99 = por %p97, %p98
    %s100 = ssub.s32 %s14, %s21
    %p101 = scmp.eq.s32.totalorder %s100, 0
    %s103 = sadd.s32 %s102, 1
    %s104 = scalar_select %p101, %s102, %s103
    %p107 = pneg %p101
    %p108 = scmp.eq.s32.totalorder %s14, 1
    %p109 = por %p107, %p108
    %p110 = scmp.ne.s32.totalorder %s102, %s105
    %p111 = scmp.eq.s32.totalorder %s14, 0
    %p112 = por %p110, %p111
    %p113 = scmp.ne.s32.totalorder %s102, %s105
    %p114 = scmp.eq.s32.totalorder %s19, 1
    %p115 = por %p113, %p114
    %p116 = scmp.ne.s32.totalorder %s105, %s106
    %p117 = scmp.eq.s32.totalorder %s19, 0
    %p118 = por %p116, %p117
    %p119 = scmp.ne.s32.totalorder %s105, %s106
    %p120 = scmp.eq.s32.totalorder %s20, 1
    %p121 = por %p119, %p120
    %p123 = scmp.ne.s32.totalorder %s106, %s122
    %p124 = scmp.eq.s32.totalorder %s20, 0
    %p125 = por %p123, %p124
    %s126 = ssub.s32 %s14, %s21
    %p127 = scmp.eq.s32.totalorder %s126, 0
    %s129 = sadd.s32 %s128, 1
    %s130 = scalar_select %p127, %s128, %s129
    %p133 = pneg %p127
    %p134 = scmp.eq.s32.totalorder %s14, 1
    %p135 = por %p133, %p134
    %p136 = scmp.ne.s32.totalorder %s128, %s131
    %p137 = scmp.eq.s32.totalorder %s14, 0
    %p138 = por %p136, %p137
    %p139 = scmp.ne.s32.totalorder %s128, %s131
    %p140 = scmp.eq.s32.totalorder %s19, 1
    %p141 = por %p139, %p140
    %p142 = scmp.ne.s32.totalorder %s131, %s132
    %p143 = scmp.eq.s32.totalorder %s19, 0
    %p144 = por %p142, %p143
    %p145 = scmp.ne.s32.totalorder %s131, %s132
    %p146 = scmp.eq.s32.totalorder %s20, 1
    %p147 = por %p145, %p146
    %p149 = scmp.ne.s32.totalorder %s132, %s148
    %p150 = scmp.eq.s32.totalorder %s20, 0
    %p151 = por %p149, %p150
    %s152 = ssub.s32 %s14, %s21
    %p153 = scmp.eq.s32.totalorder %s152, 0
    %s155 = sadd.s32 %s154, 1
    %s156 = scalar_select %p153, %s154, %s155
    %p159 = pneg %p153
    %p160 = scmp.eq.s32.totalorder %s14, 1
    %p161 = por %p159, %p160
    %p162 = scmp.ne.s32.totalorder %s154, %s157
    %p163 = scmp.eq.s32.totalorder %s14, 0
    %p164 = por %p162, %p163
    %p165 = scmp.ne.s32.totalorder %s154, %s157
    %p166 = scmp.eq.s32.totalorder %s19, 1
    %p167 = por %p165, %p166
    %p168 = scmp.ne.s32.totalorder %s157, %s158
    %p169 = scmp.eq.s32.totalorder %s19, 0
    %p170 = por %p168, %p169
    %p171 = scmp.ne.s32.totalorder %s157, %s158
    %p172 = scmp.eq.s32.totalorder %s20, 1
    %p173 = por %p171, %p172
    %p175 = scmp.ne.s32.totalorder %s158, %s174
    %p176 = scmp.eq.s32.totalorder %s20, 0
    %p177 = por %p175, %p176
    %s178 = ssub.s32 %s14, %s21
    %p179 = scmp.eq.s32.totalorder %s178, 0
    %s181 = sadd.s32 %s180, 1
    %s182 = scalar_select %p179, %s180, %s181
    %p185 = pneg %p179
    %p186 = scmp.eq.s32.totalorder %s14, 1
    %p187 = por %p185, %p186
    %p188 = scmp.ne.s32.totalorder %s180, %s183
    %p189 = scmp.eq.s32.totalorder %s14, 0
    %p190 = por %p188, %p189
    %p191 = scmp.ne.s32.totalorder %s180, %s183
    %p192 = scmp.eq.s32.totalorder %s19, 1
    %p193 = por %p191, %p192
    %p194 = scmp.ne.s32.totalorder %s183, %s184
    %p195 = scmp.eq.s32.totalorder %s19, 0
    %p196 = por %p194, %p195
    %p197 = scmp.ne.s32.totalorder %s183, %s184
    %p198 = scmp.eq.s32.totalorder %s20, 1
    %p199 = por %p197, %p198
    %p201 = scmp.ne.s32.totalorder %s184, %s200
    %p202 = scmp.eq.s32.totalorder %s20, 0
    %p203 = por %p201, %p202
    %s204 = ssub.s32 %s14, %s21
    %p205 = scmp.eq.s32.totalorder %s204, 0
    %s207 = sadd.s32 %s206, 1
    %s208 = scalar_select %p205, %s206, %s207
    %p211 = pneg %p205
    %p212 = scmp.eq.s32.totalorder %s14, 1
    %p213 = por %p211, %p212
    %p214 = scmp.ne.s32.totalorder %s206, %s209
    %p215 = scmp.eq.s32.totalorder %s14, 0
    %p216 = por %p214, %p215
    %p217 = scmp.ne.s32.totalorder %s206, %s209
    %p218 = scmp.eq.s32.totalorder %s19, 1
    %p219 = por %p217, %p218
    %p220 = scmp.ne.s32.totalorder %s209, %s210
    %p221 = scmp.eq.s32.totalorder %s19, 0
    %p222 = por %p220, %p221
    %p223 = scmp.ne.s32.totalorder %s209, %s210
    %p224 = scmp.eq.s32.totalorder %s20, 1
    %p225 = por %p223, %p224
    %p227 = scmp.ne.s32.totalorder %s210, %s226
    %p228 = scmp.eq.s32.totalorder %s20, 0
    %p229 = por %p227, %p228
    %p230 = scmp.le.s32.totalorder 1, %s14
    %p231 = scmp.lt.s32.totalorder %s14, 3
    %p232 = pnand %p230, %p231
    %p233 = pneg %p232
    // Predicated region
    $region9: #{_lambda_.1} parent=5 // pred_check
      _
    $region10: #{_lambda_.1} parent=5 // pred_check_branch
      %235 = sbr.rel (%p232) target = $region12
    $region11: #{_lambda_.1} parent=5 // pred_region
      %s236 = ssub.s32 %s14, 1
    $region12: #{_lambda_.1} parent=5 // pred_fallthru
      _
    %p237 = scmp.lt.s32.totalorder %s14, 2
    // Predicated region
    $region13: #{_lambda_.1} parent=5 // pred_check
      %p238 = pneg %p237
    $region14: #{_lambda_.1} parent=5 // pred_check_branch
      %240 = sbr.rel (%p238) target = $region16
    $region15: #{_lambda_.1} parent=5 // pred_region
      // Predicated region
      $region17: #{_lambda_.1} parent=15 // pred_check
        %p241 = pneg %p34
      $region18: #{_lambda_.1} parent=15 // pred_check_branch
        %243 = sbr.rel (%p241) target = $region20
      $region19: #{_lambda_.1} parent=15 // pred_region
        %p244 = scmp.lt.s32.totalorder %s14, 1
        %s245 = scalar_select %p244, %s14, 1
        %s246 = smul.addr %s245, 2
        %s247 = smul.addr %s246, 8
        %s248 = scalar_lea.vmem %s0, %s247
      $region20: #{_lambda_.1} parent=15 // pred_fallthru
        _
      // Predicated region
      $region21: #{_lambda_.1} parent=15 // pred_check
        %p249 = pneg %p60
      $region22: #{_lambda_.1} parent=15 // pred_check_branch
        %251 = sbr.rel (%p249) target = $region24
      $region23: #{_lambda_.1} parent=15 // pred_region
        %p252 = scmp.lt.s32.totalorder %s14, 1
        %s253 = scalar_select %p252, %s14, 1
        %s254 = smul.addr %s253, 2
        %s255 = smul.addr %s254, 8
        %s256 = scalar_lea.vmem %s1, %s255
      $region24: #{_lambda_.1} parent=15 // pred_fallthru
        _
      // Predicated region
      $region25: #{_lambda_.1} parent=15 // pred_check
        %p257 = pneg %p86
      $region26: #{_lambda_.1} parent=15 // pred_check_branch
        %259 = sbr.rel (%p257) target = $region28
      $region27: #{_lambda_.1} parent=15 // pred_region
        %p260 = scmp.lt.s32.totalorder %s14, 1
        %s261 = scalar_select %p260, %s14, 1
        %s262 = smul.addr %s261, 2
        %s263 = smul.addr %s262, 8
        %s264 = scalar_lea.vmem %s2, %s263
      $region28: #{_lambda_.1} parent=15 // pred_fallthru
        _
      // Predicated region
      $region29: #{_lambda_.1} parent=15 // pred_check
        %p265 = pneg %p112
      $region30: #{_lambda_.1} parent=15 // pred_check_branch
        %267 = sbr.rel (%p265) target = $region32
      $region31: #{_lambda_.1} parent=15 // pred_region
        %p268 = scmp.lt.s32.totalorder %s14, 1
        %s269 = scalar_select %p268, %s14, 1
        %s270 = smul.addr %s269, 2
        %s271 = smul.addr %s270, 8
        %s272 = scalar_lea.vmem %s3, %s271
      $region32: #{_lambda_.1} parent=15 // pred_fallthru
        _
      // Predicated region
      $region33: #{_lambda_.1} parent=15 // pred_check
        %p273 = pneg %p138
      $region34: #{_lambda_.1} parent=15 // pred_check_branch
        %275 = sbr.rel (%p273) target = $region36
      $region35: #{_lambda_.1} parent=15 // pred_region
        %p276 = scmp.lt.s32.totalorder %s14, 1
        %s277 = scalar_select %p276, %s14, 1
        %s278 = smul.addr %s277, 4
        %s279 = scalar_lea.vmem %s4, %s278
      $region36: #{_lambda_.1} parent=15 // pred_fallthru
        _
      // Predicated region
      $region37: #{_lambda_.1} parent=15 // pred_check
        %p280 = pneg %p164
      $region38: #{_lambda_.1} parent=15 // pred_check_branch
        %282 = sbr.rel (%p280) target = $region40
      $region39: #{_lambda_.1} parent=15 // pred_region
        %p283 = scmp.lt.s32.totalorder %s14, 1
        %s284 = scalar_select %p283, %s14, 1
        %s285 = scalar_lea.vmem %s5, %s284
      $region40: #{_lambda_.1} parent=15 // pred_fallthru
        _
    $region16: #{_lambda_.1} parent=5 // pred_fallthru
      _
    %p286 = scmp.le.s32.totalorder 1, %s14
    %p287 = scmp.lt.s32.totalorder %s14, 3
    %p288 = pnand %p286, %p287
    %p289 = pneg %p288
    // Predicated region
    $region41: #{_lambda_.1} parent=5 // pred_check
      _
    $region42: #{_lambda_.1} parent=5 // pred_check_branch
      %291 = sbr.rel (%p288) target = $region44
    $region43: #{_lambda_.1} parent=5 // pred_region
      %s292 = ssub.s32 %s14, 1
      %p293 = scmp.lt.s32.totalorder %s19, 1
      %s294 = scalar_select %p293, %s19, 1
      %s295 = smul.addr %s294, 2
      %s296 = smul.addr %s295, 8
      %s297 = scalar_lea.vmem %s0, %s296
      %p298 = pneg %p40
      %p299 = pneg %p37
      %p300 = scmp.lt.s32.totalorder %s19, 1
      %s301 = scalar_select %p300, %s19, 1
      %s302 = smul.addr %s301, 2
      %s303 = smul.addr %s302, 8
      %s304 = scalar_lea.vmem %s1, %s303
      %p305 = pneg %p66
      %p306 = pneg %p63
      %p307 = scmp.lt.s32.totalorder %s19, 1
      %s308 = scalar_select %p307, %s19, 1
      %s309 = smul.addr %s308, 2
      %s310 = smul.addr %s309, 8
      %s311 = scalar_lea.vmem %s2, %s310
      %p312 = pneg %p92
      %p313 = pneg %p89
      %p314 = scmp.lt.s32.totalorder %s19, 1
      %s315 = scalar_select %p314, %s19, 1
      %s316 = smul.addr %s315, 2
      %s317 = smul.addr %s316, 8
      %s318 = scalar_lea.vmem %s3, %s317
      %p319 = pneg %p118
      %p320 = pneg %p115
      %p321 = scmp.lt.s32.totalorder %s19, 1
      %s322 = scalar_select %p321, %s19, 1
      %s323 = smul.addr %s322, 4
      %s324 = scalar_lea.vmem %s4, %s323
      %p325 = pneg %p144
      %p326 = pneg %p141
      %p327 = scmp.lt.s32.totalorder %s19, 1
      %s328 = scalar_select %p327, %s19, 1
      %s329 = scalar_lea.vmem %s5, %s328
      %p330 = pneg %p170
      %p331 = pneg %p167
      %p332 = pneg %p196
      %p333 = pneg %p193
      %p334 = scmp.lt.s32.totalorder %s19, 1
      %s335 = scalar_select %p334, %s19, 1
      %s336 = scalar_lea.vmem %s6, %s335
      %p337 = pneg %p222
      %p338 = pneg %p219
      %p339 = scmp.lt.s32.totalorder %s19, 1
      %s340 = scalar_select %p339, %s19, 1
      %s341 = smul.addr %s340, 2
      %s342 = smul.addr %s341, 8
      %s343 = scalar_lea.vmem %s7, %s342
      %p344 = scmp.lt.s32.totalorder %s19, 1
      %s345 = scalar_select %p344, %s19, 1
      %s346 = smul.addr %s345, 2
      %s347 = smul.addr %s346, 8
      %s348 = scalar_lea.vmem %s0, %s347
      %p349 = scmp.lt.s32.totalorder %s19, 1
      %s350 = scalar_select %p349, %s19, 1
      %s351 = smul.addr %s350, 2
      %s352 = smul.addr %s351, 8
      %s353 = scalar_lea.vmem %s1, %s352
      %p354 = scmp.lt.s32.totalorder %s19, 1
      %s355 = scalar_select %p354, %s19, 1
      %s356 = smul.addr %s355, 2
      %s357 = smul.addr %s356, 8
      %s358 = scalar_lea.vmem %s2, %s357
      %p359 = scmp.lt.s32.totalorder %s19, 1
      %s360 = scalar_select %p359, %s19, 1
      %s361 = smul.addr %s360, 2
      %s362 = smul.addr %s361, 8
      %s363 = scalar_lea.vmem %s3, %s362
      %p364 = scmp.lt.s32.totalorder %s19, 1
      %s365 = scalar_select %p364, %s19, 1
      %s366 = smul.addr %s365, 4
      %s367 = scalar_lea.vmem %s4, %s366
      %p368 = scmp.lt.s32.totalorder %s19, 1
      %s369 = scalar_select %p368, %s19, 1
      %s370 = scalar_lea.vmem %s5, %s369
      %p371 = scmp.lt.s32.totalorder %s19, 1
      %s372 = scalar_select %p371, %s19, 1
      %s373 = scalar_lea.vmem %s6, %s372
      %p374 = scmp.lt.s32.totalorder %s19, 1
      %s375 = scalar_select %p374, %s19, 1
      %s376 = smul.addr %s375, 2
      %s377 = smul.addr %s376, 8
      %s378 = scalar_lea.vmem %s7, %s377
      %v379 = vld [vmem:[%s348] sm:$0xff]
      %v380 = vld [vmem:[%s348 + $0x8] sm:$0xff]
      %v381 = vld [vmem:[%s353] sm:$0xff]
      %v382 = vld [vmem:[%s353 + $0x8] sm:$0xff]
      %v383 = vld [vmem:[%s358] sm:$0xff]
      %v384 = vld [vmem:[%s358 + $0x8] sm:$0xff]
      %v385 = vld [vmem:[%s363] sm:$0xff]
      %v386 = vld [vmem:[%s363 + $0x8] sm:$0xff]
      %v387 = vlaneseq
      %v388 = vand.u32 %v387, 127
      %389 = vset.pattern.permute.xlu0 0
      %390 = vperm.xlu0 %389, %v381
      %v391 = vpop.permute.xlu0 %390
      %392 = vset.pattern.permute.xlu0 0
      %393 = vperm.xlu0 %392, %v382
      %v394 = vpop.permute.xlu0 %393
      %vm395 = vcmp.eq.s32.totalorder %v391, %v388
      %vm396 = vcmp.eq.s32.totalorder %v394, %v388
      %v397 = vsel %vm395, 1, 0
      %v398 = vsel %vm396, 1, 0
      %v399 = vcvt.s32.f32 %v397
      %v400 = vcvt.s32.f32 %v398
      %vm401 = vcmp.ne.s32.totalorder %v381, 4294967295
      %vm402 = vcmp.ne.s32.totalorder %v382, 4294967295
      %v403 = vsel %vm401, 1, 0
      %v404 = vsel %vm402, 1, 0
      %v405 = vcvt.s32.f32 %v403
      %v406 = vcvt.s32.f32 %v404
      %vm407 = vcmask 7168
      %v408 = vsel %vm407, %v405, 0.0
      %v409 = vsel %vm407, %v406, 0.0
      %v410 = vadd.f32 %v408, %v409
      %411 = vadd.xlane.f32.xlu0 %v410
      %v412 = vpop.xlane.xlu0 %411
      %v413 = vrot.slane %v412, 4
      %v414 = vadd.f32 %v412, %v413
      %v415 = vrot.slane %v414, 2
      %v416 = vadd.f32 %v414, %v415
      %v417 = vrot.slane %v416, 1
      %v418 = vadd.f32 %v416, %v417
      %s419 = vtos %v418
      %s420 = smax.f32 %s419, 1.0
      %v421 = vstv %s420
      %v422 = vrcp.pop %v421
      %s423 = vtos %v422
      %424 = vset.pattern.permute.xlu0 0
      %425 = vperm.xlu0 %424, %v385
      %v426 = vpop.permute.xlu0 %425
      %427 = vset.pattern.permute.xlu0 0
      %428 = vperm.xlu0 %427, %v386
      %v429 = vpop.permute.xlu0 %428
      %vm430 = vcmp.eq.s32.totalorder %v426, %v388
      %vm431 = vcmp.eq.s32.totalorder %v429, %v388
      %v432 = vsel %vm430, 1, 0
      %v433 = vsel %vm431, 1, 0
      %v434 = vcvt.s32.f32 %v432
      %v435 = vcvt.s32.f32 %v433
      %vm436 = vcmp.ne.s32.totalorder %v385, 4294967295
      %vm437 = vcmp.ne.s32.totalorder %v386, 4294967295
      %v438 = vsel %vm436, 1, 0
      %v439 = vsel %vm437, 1, 0
      %v440 = vcvt.s32.f32 %v438
      %v441 = vcvt.s32.f32 %v439
      %v442 = vsel %vm407, %v440, 0.0
      %v443 = vsel %vm407, %v441, 0.0
      %v444 = vadd.f32 %v442, %v443
      %445 = vadd.xlane.f32.xlu0 %v444
      %v446 = vpop.xlane.xlu0 %445
      %v447 = vrot.slane %v446, 4
      %v448 = vadd.f32 %v446, %v447
      %v449 = vrot.slane %v448, 2
      %v450 = vadd.f32 %v448, %v449
      %v451 = vrot.slane %v450, 1
      %v452 = vadd.f32 %v450, %v451
      %s453 = vtos %v452
      %s454 = smax.f32 %s453, 1.0
      %v455 = vstv %s454
      %v456 = vrcp.pop %v455
      %s457 = vtos %v456
      %vm458 = vcmask 31744
      %v459 = vsel %vm458, %v399, 0.0
      %v460 = vsel %vm458, %v400, 0.0
      %v461 = vadd.f32 %v459, %v460
      %v462 = vrot.slane %v461, 4
      %v463 = vadd.f32 %v461, %v462
      %v464 = vrot.slane %v463, 2
      %v465 = vadd.f32 %v463, %v464
      %v466 = vrot.slane %v465, 1
      %v467 = vadd.f32 %v465, %v466
      %vm468 = vcmp.gt.f32.partialorder %v467, 0.0
      %v469 = vmax.f32 %v467, 1.0
      %v470 = vrcp.pop %v469
      %v471 = vmul.f32 1.0, %v470
      %v472 = vsel %vm468, %v471, 0.0
      %v473 = vmul.f32 %v399, %v472
      %v474 = vmul.f32 %v400, %v472
      %475 = vxpose.xlu0.b32.start [1/16] %v473, 128
      %476 = vxpose.xlu0.b32.cont [2/16] %v474, 128
      %477 = vxpose.xlu0.b32.cont [3/16] 0.0, 128
      %478 = vxpose.xlu0.b32.cont [4/16] 0.0, 128
      %479 = vxpose.xlu0.b32.cont [5/16] 0.0, 128
      %480 = vxpose.xlu0.b32.cont [6/16] 0.0, 128
      %481 = vxpose.xlu0.b32.cont [7/16] 0.0, 128
      %482 = vxpose.xlu0.b32.cont [8/16] 0.0, 128
      %483 = vxpose.xlu0.b32.cont [9/16] 0.0, 128
      %484 = vxpose.xlu0.b32.cont [10/16] 0.0, 128
      %485 = vxpose.xlu0.b32.cont [11/16] 0.0, 128
      %486 = vxpose.xlu0.b32.cont [12/16] 0.0, 128
      %487 = vxpose.xlu0.b32.cont [13/16] 0.0, 128
      %488 = vxpose.xlu0.b32.cont [14/16] 0.0, 128
      %489 = vxpose.xlu0.b32.cont [15/16] 0.0, 128
      %490 = vxpose.xlu0.b32.end [16/16] 0.0, 128
      %v491 = vpop.trf.xlu0
      %v492 = vpop.trf.xlu0
      %v493 = vpop.trf.xlu0
      %v494 = vpop.trf.xlu0
      %v495 = vpop.trf.xlu0
      %v496 = vpop.trf.xlu0
      %v497 = vpop.trf.xlu0
      %v498 = vpop.trf.xlu0
      %v499 = vpop.trf.xlu0
      %v500 = vpop.trf.xlu0
      %v501 = vpop.trf.xlu0
      %v502 = vpop.trf.xlu0
      %v503 = vpop.trf.xlu0
      %v504 = vpop.trf.xlu0
      %v505 = vpop.trf.xlu0
      %v506 = vpop.trf.xlu0
      %vm507 = vcmask 130048
      %v509 = vsel %vm507, %v491, 0
      %511 = vmatprep.subr.mxu0 0.0
      %512 = vmatpush1.msra.mxu0 %v379
      %513 = vmatprep.subr.mxu0 0.0
      %514 = vmatpush1.msra.mxu0 %v380
      %515 = vmatprep.subr.mxu0 0.0
      %516 = vmatpush1.msra.mxu0 0.0
      %517 = vmatprep.subr.mxu0 0.0
      %518 = vmatpush1.msra.mxu0 0.0
      %519 = vmatprep.subr.mxu0 0.0
      %520 = vmatpush1.msra.mxu0 0.0
      %521 = vmatprep.subr.mxu0 0.0
      %522 = vmatpush1.msra.mxu0 0.0
      %523 = vmatprep.subr.mxu0 0.0
      %524 = vmatpush1.msra.mxu0 0.0
      %525 = vmatprep.subr.mxu0 0.0
      %526 = vmatpush1.msra.mxu0 0.0
      %527 = vmatprep.subr.mxu0 0.0
      %528 = vmatpush1.msra.mxu0 0.0
      %529 = vmatprep.subr.mxu0 0.0
      %530 = vmatpush1.msra.mxu0 0.0
      %531 = vmatprep.subr.mxu0 0.0
      %532 = vmatpush1.msra.mxu0 0.0
      %533 = vmatprep.subr.mxu0 0.0
      %534 = vmatpush1.msra.mxu0 0.0
      %535 = vmatprep.subr.mxu0 0.0
      %536 = vmatpush1.msra.mxu0 0.0
      %537 = vmatprep.subr.mxu0 0.0
      %538 = vmatpush1.msra.mxu0 0.0
      %539 = vmatprep.subr.mxu0 0.0
      %540 = vmatpush1.msra.mxu0 0.0
      %541 = vmatprep.subr.mxu0 0.0
      %542 = vmatpush1.msra.mxu0 0.0
      %543 = vmatprep.subr.mxu0 0.0
      %544 = vmatpush1.msra.mxu0 0.0
      %545 = vmatprep.subr.mxu0 0.0
      %546 = vmatpush1.msra.mxu0 0.0
      %547 = vmatprep.subr.mxu0 0.0
      %548 = vmatpush1.msra.mxu0 0.0
      %549 = vmatprep.subr.mxu0 0.0
      %550 = vmatpush1.msra.mxu0 0.0
      %551 = vmatprep.subr.mxu0 0.0
      %552 = vmatpush1.msra.mxu0 0.0
      %553 = vmatprep.subr.mxu0 0.0
      %554 = vmatpush1.msra.mxu0 0.0
      %555 = vmatprep.subr.mxu0 0.0
      %556 = vmatpush1.msra.mxu0 0.0
      %557 = vmatprep.subr.mxu0 0.0
      %558 = vmatpush1.msra.mxu0 0.0
      %559 = vmatprep.subr.mxu0 0.0
      %560 = vmatpush1.msra.mxu0 0.0
      %561 = vmatprep.subr.mxu0 0.0
      %562 = vmatpush1.msra.mxu0 0.0
      %563 = vmatprep.subr.mxu0 0.0
      %564 = vmatpush1.msra.mxu0 0.0
      %565 = vmatprep.subr.mxu0 0.0
      %566 = vmatpush1.msra.mxu0 0.0
      %567 = vmatprep.subr.mxu0 0.0
      %568 = vmatpush1.msra.mxu0 0.0
      %569 = vmatprep.subr.mxu0 0.0
      %570 = vmatpush1.msra.mxu0 0.0
      %571 = vmatprep.subr.mxu0 0.0
      %572 = vmatpush1.msra.mxu0 0.0
      %573 = vmatprep.subr.mxu0 0.0
      %574 = vmatpush1.msra.mxu0 0.0
      %575 = vmatprep.mubr.f32.mxu0 0.0
      %576 = vmatmul.mubr.f32.gmra.mrb[0].mxu0 %v509
      %v577 = vpop.f32.mrb[0].mxu0
      %v578 = vadd.f32 0.0, %v577
      %v579 = vpop.f32.mrb[0].mxu0
      %580 = vdwg.mxu0
      %v581 = vmul.f32 %v578, 2.0
      %v582 = vmul.f32 %v578, %v578
      %vm583 = vcmask 261120
      %v585 = vsel %vm583, 1.0, 0
      %v588 = vsel %vm583, %v582, 0
      %590 = vmatprep.subr.mxu0 0.0
      %591 = vmatpush1.xpose.msra.mxu0 %v588
      %592 = vmatprep.subr.mxu0 0.0
      %593 = vmatpush1.xpose.msra.mxu0 0.0
      %594 = vmatprep.subr.mxu0 0.0
      %595 = vmatpush1.xpose.msra.mxu0 0.0
      %596 = vmatprep.subr.mxu0 0.0
      %597 = vmatpush1.xpose.msra.mxu0 0.0
      %598 = vmatprep.subr.mxu0 0.0
      %599 = vmatpush1.xpose.msra.mxu0 0.0
      %600 = vmatprep.subr.mxu0 0.0
      %601 = vmatpush1.xpose.msra.mxu0 0.0
      %602 = vmatprep.subr.mxu0 0.0
      %603 = vmatpush1.xpose.msra.mxu0 0.0
      %604 = vmatprep.subr.mxu0 0.0
      %605 = vmatpush1.xpose.msra.mxu0 0.0
      %606 = vmatprep.subr.mxu0 0.0
      %607 = vmatpush1.xpose.msra.mxu0 0.0
      %608 = vmatprep.subr.mxu0 0.0
      %609 = vmatpush1.xpose.msra.mxu0 0.0
      %610 = vmatprep.subr.mxu0 0.0
      %611 = vmatpush1.xpose.msra.mxu0 0.0
      %612 = vmatprep.subr.mxu0 0.0
      %613 = vmatpush1.xpose.msra.mxu0 0.0
      %614 = vmatprep.subr.mxu0 0.0
      %615 = vmatpush1.xpose.msra.mxu0 0.0
      %616 = vmatprep.subr.mxu0 0.0
      %617 = vmatpush1.xpose.msra.mxu0 0.0
      %618 = vmatprep.subr.mxu0 0.0
      %619 = vmatpush1.xpose.msra.mxu0 0.0
      %620 = vmatprep.subr.mxu0 0.0
      %621 = vmatpush1.xpose.msra.mxu0 0.0
      %622 = vmatprep.subr.mxu0 0.0
      %623 = vmatpush1.xpose.msra.mxu0 0.0
      %624 = vmatprep.subr.mxu0 0.0
      %625 = vmatpush1.xpose.msra.mxu0 0.0
      %626 = vmatprep.subr.mxu0 0.0
      %627 = vmatpush1.xpose.msra.mxu0 0.0
      %628 = vmatprep.subr.mxu0 0.0
      %629 = vmatpush1.xpose.msra.mxu0 0.0
      %630 = vmatprep.subr.mxu0 0.0
      %631 = vmatpush1.xpose.msra.mxu0 0.0
      %632 = vmatprep.subr.mxu0 0.0
      %633 = vmatpush1.xpose.msra.mxu0 0.0
      %634 = vmatprep.subr.mxu0 0.0
      %635 = vmatpush1.xpose.msra.mxu0 0.0
      %636 = vmatprep.subr.mxu0 0.0
      %637 = vmatpush1.xpose.msra.mxu0 0.0
      %638 = vmatprep.subr.mxu0 0.0
      %639 = vmatpush1.xpose.msra.mxu0 0.0
      %640 = vmatprep.subr.mxu0 0.0
      %641 = vmatpush1.xpose.msra.mxu0 0.0
      %642 = vmatprep.subr.mxu0 0.0
      %643 = vmatpush1.xpose.msra.mxu0 0.0
      %644 = vmatprep.subr.mxu0 0.0
      %645 = vmatpush1.xpose.msra.mxu0 0.0
      %646 = vmatprep.subr.mxu0 0.0
      %647 = vmatpush1.xpose.msra.mxu0 0.0
      %648 = vmatprep.subr.mxu0 0.0
      %649 = vmatpush1.xpose.msra.mxu0 0.0
      %650 = vmatprep.subr.mxu0 0.0
      %651 = vmatpush1.xpose.msra.mxu0 0.0
      %652 = vmatprep.subr.mxu0 0.0
      %653 = vmatpush1.xpose.msra.mxu0 0.0
      %654 = vmatprep.mubr.f32.mxu0 0.0
      %655 = vmatmul.mubr.f32.gmra.mrb[0].mxu0 %v585
      %v656 = vpop.f32.mrb[0].mxu0
      %v657 = vadd.f32 0.0, %v656
      %v658 = vpop.f32.mrb[0].mxu0
      %659 = vdwg.mxu0
      %v660 = vsub.f32 0.0, %v657
      %v661 = vadd.f32 %v581, 0.0
      %v662 = vadd.f32 %v660, 0.0
      %v663 = vlaneseq
      %v664 = vshrl.u32 %v663, 7
      %v665 = vsub.s32 0, %v664
      %v666 = vrot.slane %v662, %v665
      %v668 = vsel %vm583, %v379, 0
      %v671 = vsel %vm583, %v380, 0
      %v674 = vsel %vm583, %v661, 0
      %676 = vmatprep.subr.mxu0 0.0
      %677 = vmatpush1.xpose.msra.mxu0 %v674
      %678 = vmatprep.subr.mxu0 0.0
      %679 = vmatpush1.xpose.msra.mxu0 0.0
      %680 = vmatprep.subr.mxu0 0.0
      %681 = vmatpush1.xpose.msra.mxu0 0.0
      %682 = vmatprep.subr.mxu0 0.0
      %683 = vmatpush1.xpose.msra.mxu0 0.0
      %684 = vmatprep.subr.mxu0 0.0
      %685 = vmatpush1.xpose.msra.mxu0 0.0
      %686 = vmatprep.subr.mxu0 0.0
      %687 = vmatpush1.xpose.msra.mxu0 0.0
      %688 = vmatprep.subr.mxu0 0.0
      %689 = vmatpush1.xpose.msra.mxu0 0.0
      %690 = vmatprep.subr.mxu0 0.0
      %691 = vmatpush1.xpose.msra.mxu0 0.0
      %692 = vmatprep.subr.mxu0 0.0
      %693 = vmatpush1.xpose.msra.mxu0 0.0
      %694 = vmatprep.subr.mxu0 0.0
      %695 = vmatpush1.xpose.msra.mxu0 0.0
      %696 = vmatprep.subr.mxu0 0.0
      %697 = vmatpush1.xpose.msra.mxu0 0.0
      %698 = vmatprep.subr.mxu0 0.0
      %699 = vmatpush1.xpose.msra.mxu0 0.0
      %700 = vmatprep.subr.mxu0 0.0
      %701 = vmatpush1.xpose.msra.mxu0 0.0
      %702 = vmatprep.subr.mxu0 0.0
      %703 = vmatpush1.xpose.msra.mxu0 0.0
      %704 = vmatprep.subr.mxu0 0.0
      %705 = vmatpush1.xpose.msra.mxu0 0.0
      %706 = vmatprep.subr.mxu0 0.0
      %707 = vmatpush1.xpose.msra.mxu0 0.0
      %708 = vmatprep.subr.mxu0 0.0
      %709 = vmatpush1.xpose.msra.mxu0 0.0
      %710 = vmatprep.subr.mxu0 0.0
      %711 = vmatpush1.xpose.msra.mxu0 0.0
      %712 = vmatprep.subr.mxu0 0.0
      %713 = vmatpush1.xpose.msra.mxu0 0.0
      %714 = vmatprep.subr.mxu0 0.0
      %715 = vmatpush1.xpose.msra.mxu0 0.0
      %716 = vmatprep.subr.mxu0 0.0
      %717 = vmatpush1.xpose.msra.mxu0 0.0
      %718 = vmatprep.subr.mxu0 0.0
      %719 = vmatpush1.xpose.msra.mxu0 0.0
      %720 = vmatprep.subr.mxu0 0.0
      %721 = vmatpush1.xpose.msra.mxu0 0.0
      %722 = vmatprep.subr.mxu0 0.0
      %723 = vmatpush1.xpose.msra.mxu0 0.0
      %724 = vmatprep.subr.mxu0 0.0
      %725 = vmatpush1.xpose.msra.mxu0 0.0
      %726 = vmatprep.subr.mxu0 0.0
      %727 = vmatpush1.xpose.msra.mxu0 0.0
      %728 = vmatprep.subr.mxu0 0.0
      %729 = vmatpush1.xpose.msra.mxu0 0.0
      %730 = vmatprep.subr.mxu0 0.0
      %731 = vmatpush1.xpose.msra.mxu0 0.0
      %732 = vmatprep.subr.mxu0 0.0
      %733 = vmatpush1.xpose.msra.mxu0 0.0
      %734 = vmatprep.subr.mxu0 0.0
      %735 = vmatpush1.xpose.msra.mxu0 0.0
      %736 = vmatprep.subr.mxu0 0.0
      %737 = vmatpush1.xpose.msra.mxu0 0.0
      %738 = vmatprep.subr.mxu0 0.0
      %739 = vmatpush1.xpose.msra.mxu0 0.0
      %740 = vmatprep.mubr.f32.mxu0 0.0
      %741 = vmatmul.mubr.f32.gmra.mrb[0].mxu0 %v668
      %v742 = vpop.f32.mrb[0].mxu0
      %v743 = vadd.f32 %v666, %v742
      %v744 = vpop.f32.mrb[0].mxu0
      %745 = vmatprep.mubr.f32.mxu0 0.0
      %746 = vmatmul.mubr.f32.gmra.mrb[0].mxu0 %v671
      %v747 = vpop.f32.mrb[0].mxu0
      %v748 = vadd.f32 %v666, %v747
      %v749 = vpop.f32.mrb[0].mxu0
      %750 = vdwg.mxu0
      %v751 = vsel %vm458, %v743, -inf
      %752 = vmax.xlane.f32.xlu0 %v751
      %v753 = vpop.xlane.xlu0 %752
      %v754 = vsel %vm458, %v748, -inf
      %755 = vmax.xlane.f32.xlu0 %v754
      %v756 = vpop.xlane.xlu0 %755
      %v757 = vsub.f32 %v743, %v753
      %v758 = vsub.f32 %v748, %v756
      %v759 = vmul.f32 %v757, 1.442695
      %v760 = vpow.pop %v759
      %v761 = vmul.f32 %v758, 1.442695
      %v762 = vpow.pop %v761
      %v763 = vsel %vm458, %v760, 0.0
      %764 = vadd.xlane.f32.xlu0 %v763
      %v765 = vpop.xlane.xlu0 %764
      %v766 = vsel %vm458, %v762, 0.0
      %767 = vadd.xlane.f32.xlu0 %v766
      %v768 = vpop.xlane.xlu0 %767
      %v769 = vlog2.pop %v765
      %v770 = vmul.f32 %v769, 0.6931472
      %v771 = vlog2.pop %v768
      %v772 = vmul.f32 %v771, 0.6931472
      %v773 = vsub.f32 %v757, %v770
      %v774 = vsub.f32 %v758, %v772
      %v775 = vmul.f32 %v399, %v773
      %v776 = vmul.f32 %v400, %v774
      %v777 = vsel %vm458, %v775, 0.0
      %778 = vadd.xlane.f32.xlu0 %v777
      %v779 = vpop.xlane.xlu0 %778
      %v780 = vsel %vm458, %v776, 0.0
      %781 = vadd.xlane.f32.xlu0 %v780
      %v782 = vpop.xlane.xlu0 %781
      %v783 = vsub.f32 0.0, %v779
      %v784 = vsub.f32 0.0, %v782
      %v785 = vmul.f32 %v405, %v783
      %v786 = vmul.f32 %v406, %v784
      %v787 = vsel %vm407, %v785, 0.0
      %v788 = vsel %vm407, %v786, 0.0
      %v789 = vadd.f32 %v787, %v788
      %790 = vadd.xlane.f32.xlu0 %v789
      %v791 = vpop.xlane.xlu0 %790
      %v792 = vrot.slane %v791, 4
      %v793 = vadd.f32 %v791, %v792
      %v794 = vrot.slane %v793, 2
      %v795 = vadd.f32 %v793, %v794
      %v796 = vrot.slane %v795, 1
      %v797 = vadd.f32 %v795, %v796
      %s798 = vtos %v797
      %s799 = smul.f32 %s798, %s423
      %v800 = vrcp.pop %v765
      %v801 = vrcp.pop %v768
      %v802 = vmul.f32 %v760, %v800
      %v803 = vmul.f32 %v762, %v801
      %v804 = vstv %s423
      %v805 = vmul.f32 %v405, %v804
      %v806 = vmul.f32 %v406, %v804
      %v807 = vsub.f32 %v802, %v399
      %v808 = vsub.f32 %v803, %v400
      %810 = vset.pattern.permute.xlu0 0
      %811 = vperm.xlu0 %810, %v805
      %v812 = vpop.permute.xlu0 %811
      %815 = vset.pattern.permute.xlu0 0
      %816 = vperm.xlu0 %815, %v806
      %v817 = vpop.permute.xlu0 %816
      %v819 = vmul.f32 %v812, %v807
      %v820 = vmul.f32 %v817, %v808
      %821 = vxpose.xlu0.b32.start [1/16] %v819, 128
      %822 = vxpose.xlu0.b32.cont [2/16] %v820, 128
      %823 = vxpose.xlu0.b32.cont [3/16] 0.0, 128
      %824 = vxpose.xlu0.b32.cont [4/16] 0.0, 128
      %825 = vxpose.xlu0.b32.cont [5/16] 0.0, 128
      %826 = vxpose.xlu0.b32.cont [6/16] 0.0, 128
      %827 = vxpose.xlu0.b32.cont [7/16] 0.0, 128
      %828 = vxpose.xlu0.b32.cont [8/16] 0.0, 128
      %829 = vxpose.xlu0.b32.cont [9/16] 0.0, 128
      %830 = vxpose.xlu0.b32.cont [10/16] 0.0, 128
      %831 = vxpose.xlu0.b32.cont [11/16] 0.0, 128
      %832 = vxpose.xlu0.b32.cont [12/16] 0.0, 128
      %833 = vxpose.xlu0.b32.cont [13/16] 0.0, 128
      %834 = vxpose.xlu0.b32.cont [14/16] 0.0, 128
      %835 = vxpose.xlu0.b32.cont [15/16] 0.0, 128
      %836 = vxpose.xlu0.b32.end [16/16] 0.0, 128
      %v837 = vpop.trf.xlu0
      %v838 = vpop.trf.xlu0
      %v839 = vpop.trf.xlu0
      %v840 = vpop.trf.xlu0
      %v841 = vpop.trf.xlu0
      %v842 = vpop.trf.xlu0
      %v843 = vpop.trf.xlu0
      %v844 = vpop.trf.xlu0
      %v845 = vpop.trf.xlu0
      %v846 = vpop.trf.xlu0
      %v847 = vpop.trf.xlu0
      %v848 = vpop.trf.xlu0
      %v849 = vpop.trf.xlu0
      %v850 = vpop.trf.xlu0
      %v851 = vpop.trf.xlu0
      %v852 = vpop.trf.xlu0
      %v854 = vsel %vm507, %v837, 0
      %856 = vmatprep.subr.mxu0 0.0
      %857 = vmatpush1.msra.mxu0 %v379
      %858 = vmatprep.subr.mxu0 0.0
      %859 = vmatpush1.msra.mxu0 %v380
      %860 = vmatprep.subr.mxu0 0.0
      %861 = vmatpush1.msra.mxu0 0.0
      %862 = vmatprep.subr.mxu0 0.0
      %863 = vmatpush1.msra.mxu0 0.0
      %864 = vmatprep.subr.mxu0 0.0
      %865 = vmatpush1.msra.mxu0 0.0
      %866 = vmatprep.subr.mxu0 0.0
      %867 = vmatpush1.msra.mxu0 0.0
      %868 = vmatprep.subr.mxu0 0.0
      %869 = vmatpush1.msra.mxu0 0.0
      %870 = vmatprep.subr.mxu0 0.0
      %871 = vmatpush1.msra.mxu0 0.0
      %872 = vmatprep.subr.mxu0 0.0
      %873 = vmatpush1.msra.mxu0 0.0
      %874 = vmatprep.subr.mxu0 0.0
      %875 = vmatpush1.msra.mxu0 0.0
      %876 = vmatprep.subr.mxu0 0.0
      %877 = vmatpush1.msra.mxu0 0.0
      %878 = vmatprep.subr.mxu0 0.0
      %879 = vmatpush1.msra.mxu0 0.0
      %880 = vmatprep.subr.mxu0 0.0
      %881 = vmatpush1.msra.mxu0 0.0
      %882 = vmatprep.subr.mxu0 0.0
      %883 = vmatpush1.msra.mxu0 0.0
      %884 = vmatprep.subr.mxu0 0.0
      %885 = vmatpush1.msra.mxu0 0.0
      %886 = vmatprep.subr.mxu0 0.0
      %887 = vmatpush1.msra.mxu0 0.0
      %888 = vmatprep.subr.mxu0 0.0
      %889 = vmatpush1.msra.mxu0 0.0
      %890 = vmatprep.subr.mxu0 0.0
      %891 = vmatpush1.msra.mxu0 0.0
      %892 = vmatprep.subr.mxu0 0.0
      %893 = vmatpush1.msra.mxu0 0.0
      %894 = vmatprep.subr.mxu0 0.0
      %895 = vmatpush1.msra.mxu0 0.0
      %896 = vmatprep.subr.mxu0 0.0
      %897 = vmatpush1.msra.mxu0 0.0
      %898 = vmatprep.subr.mxu0 0.0
      %899 = vmatpush1.msra.mxu0 0.0
      %900 = vmatprep.subr.mxu0 0.0
      %901 = vmatpush1.msra.mxu0 0.0
      %902 = vmatprep.subr.mxu0 0.0
      %903 = vmatpush1.msra.mxu0 0.0
      %904 = vmatprep.subr.mxu0 0.0
      %905 = vmatpush1.msra.mxu0 0.0
      %906 = vmatprep.subr.mxu0 0.0
      %907 = vmatpush1.msra.mxu0 0.0
      %908 = vmatprep.subr.mxu0 0.0
      %909 = vmatpush1.msra.mxu0 0.0
      %910 = vmatprep.subr.mxu0 0.0
      %911 = vmatpush1.msra.mxu0 0.0
      %912 = vmatprep.subr.mxu0 0.0
      %913 = vmatpush1.msra.mxu0 0.0
      %914 = vmatprep.subr.mxu0 0.0
      %915 = vmatpush1.msra.mxu0 0.0
      %916 = vmatprep.subr.mxu0 0.0
      %917 = vmatpush1.msra.mxu0 0.0
      %918 = vmatprep.subr.mxu0 0.0
      %919 = vmatpush1.msra.mxu0 0.0
      %920 = vmatprep.mubr.f32.mxu0 0.0
      %921 = vmatmul.mubr.f32.gmra.mrb[0].mxu0 %v854
      %v922 = vpop.f32.mrb[0].mxu0
      %v923 = vadd.f32 0.0, %v922
      %v924 = vpop.f32.mrb[0].mxu0
      %925 = vdwg.mxu0
      %v926 = vsel %vm458, %v819, 0.0
      %v927 = vsel %vm458, %v820, 0.0
      %v928 = vadd.f32 %v926, %v927
      %v929 = vrot.slane %v928, 4
      %v930 = vadd.f32 %v928, %v929
      %v931 = vrot.slane %v930, 2
      %v932 = vadd.f32 %v930, %v931
      %v933 = vrot.slane %v932, 1
      %v934 = vadd.f32 %v932, %v933
      %v935 = vmul.f32 %v923, 0.1
      %v936 = vsub.f32 0.0, %v935
      %v937 = vmul.f32 %v934, 0.1
      %v938 = vsub.f32 0.0, %v937
      %v939 = vadd.f32 %v936, %v581
      %v940 = vadd.f32 %v938, %v660
      %v941 = vlaneseq
      %v942 = vshrl.u32 %v941, 7
      %v943 = vsub.s32 0, %v942
      %v944 = vrot.slane %v940, %v943
      %v946 = vsel %vm583, %v383, 0
      %v949 = vsel %vm583, %v384, 0
      %v952 = vsel %vm583, %v939, 0
      %954 = vmatprep.subr.mxu0 0.0
      %955 = vmatpush1.xpose.msra.mxu0 %v952
      %956 = vmatprep.subr.mxu0 0.0
      %957 = vmatpush1.xpose.msra.mxu0 0.0
      %958 = vmatprep.subr.mxu0 0.0
      %959 = vmatpush1.xpose.msra.mxu0 0.0
      %960 = vmatprep.subr.mxu0 0.0
      %961 = vmatpush1.xpose.msra.mxu0 0.0
      %962 = vmatprep.subr.mxu0 0.0
      %963 = vmatpush1.xpose.msra.mxu0 0.0
      %964 = vmatprep.subr.mxu0 0.0
      %965 = vmatpush1.xpose.msra.mxu0 0.0
      %966 = vmatprep.subr.mxu0 0.0
      %967 = vmatpush1.xpose.msra.mxu0 0.0
      %968 = vmatprep.subr.mxu0 0.0
      %969 = vmatpush1.xpose.msra.mxu0 0.0
      %970 = vmatprep.subr.mxu0 0.0
      %971 = vmatpush1.xpose.msra.mxu0 0.0
      %972 = vmatprep.subr.mxu0 0.0
      %973 = vmatpush1.xpose.msra.mxu0 0.0
      %974 = vmatprep.subr.mxu0 0.0
      %975 = vmatpush1.xpose.msra.mxu0 0.0
      %976 = vmatprep.subr.mxu0 0.0
      %977 = vmatpush1.xpose.msra.mxu0 0.0
      %978 = vmatprep.subr.mxu0 0.0
      %979 = vmatpush1.xpose.msra.mxu0 0.0
      %980 = vmatprep.subr.mxu0 0.0
      %981 = vmatpush1.xpose.msra.mxu0 0.0
      %982 = vmatprep.subr.mxu0 0.0
      %983 = vmatpush1.xpose.msra.mxu0 0.0
      %984 = vmatprep.subr.mxu0 0.0
      %985 = vmatpush1.xpose.msra.mxu0 0.0
      %986 = vmatprep.subr.mxu0 0.0
      %987 = vmatpush1.xpose.msra.mxu0 0.0
      %988 = vmatprep.subr.mxu0 0.0
      %989 = vmatpush1.xpose.msra.mxu0 0.0
      %990 = vmatprep.subr.mxu0 0.0
      %991 = vmatpush1.xpose.msra.mxu0 0.0
      %992 = vmatprep.subr.mxu0 0.0
      %993 = vmatpush1.xpose.msra.mxu0 0.0
      %994 = vmatprep.subr.mxu0 0.0
      %995 = vmatpush1.xpose.msra.mxu0 0.0
      %996 = vmatprep.subr.mxu0 0.0
      %997 = vmatpush1.xpose.msra.mxu0 0.0
      %998 = vmatprep.subr.mxu0 0.0
      %999 = vmatpush1.xpose.msra.mxu0 0.0
      %1000 = vmatprep.subr.mxu0 0.0
      %1001 = vmatpush1.xpose.msra.mxu0 0.0
      %1002 = vmatprep.subr.mxu0 0.0
      %1003 = vmatpush1.xpose.msra.mxu0 0.0
      %1004 = vmatprep.subr.mxu0 0.0
      %1005 = vmatpush1.xpose.msra.mxu0 0.0
      %1006 = vmatprep.subr.mxu0 0.0
      %1007 = vmatpush1.xpose.msra.mxu0 0.0
      %1008 = vmatprep.subr.mxu0 0.0
      %1009 = vmatpush1.xpose.msra.mxu0 0.0
      %1010 = vmatprep.subr.mxu0 0.0
      %1011 = vmatpush1.xpose.msra.mxu0 0.0
      %1012 = vmatprep.subr.mxu0 0.0
      %1013 = vmatpush1.xpose.msra.mxu0 0.0
      %1014 = vmatprep.subr.mxu0 0.0
      %1015 = vmatpush1.xpose.msra.mxu0 0.0
      %1016 = vmatprep.subr.mxu0 0.0
      %1017 = vmatpush1.xpose.msra.mxu0 0.0
      %1018 = vmatprep.mubr.f32.mxu0 0.0
      %1019 = vmatmul.mubr.f32.gmra.mrb[0].mxu0 %v946
      %v1020 = vpop.f32.mrb[0].mxu0
      %v1021 = vadd.f32 %v944, %v1020
      %v1022 = vpop.f32.mrb[0].mxu0
      %1023 = vmatprep.mubr.f32.mxu0 0.0
      %1024 = vmatmul.mubr.f32.gmra.mrb[0].mxu0 %v949
      %v1025 = vpop.f32.mrb[0].mxu0
      %v1026 = vadd.f32 %v944, %v1025
      %v1027 = vpop.f32.mrb[0].mxu0
      %1028 = vdwg.mxu0
      %v1029 = vsel %vm458, %v1021, -inf
      %1030 = vmax.xlane.f32.xlu0 %v1029
      %v1031 = vpop.xlane.xlu0 %1030
      %v1032 = vsel %vm458, %v1026, -inf
      %1033 = vmax.xlane.f32.xlu0 %v1032
      %v1034 = vpop.xlane.xlu0 %1033
      %v1035 = vsub.f32 %v1021, %v1031
      %v1036 = vsub.f32 %v1026, %v1034
      %v1037 = vmul.f32 %v1035, 1.442695
      %v1038 = vpow.pop %v1037
      %v1039 = vmul.f32 %v1036, 1.442695
      %v1040 = vpow.pop %v1039
      %v1041 = vsel %vm458, %v1038, 0.0
      %1042 = vadd.xlane.f32.xlu0 %v1041
      %v1043 = vpop.xlane.xlu0 %1042
      %v1044 = vsel %vm458, %v1040, 0.0
      %1045 = vadd.xlane.f32.xlu0 %v1044
      %v1046 = vpop.xlane.xlu0 %1045
      %v1047 = vlog2.pop %v1043
      %v1048 = vmul.f32 %v1047, 0.6931472
      %v1049 = vlog2.pop %v1046
      %v1050 = vmul.f32 %v1049, 0.6931472
      %v1051 = vsub.f32 %v1035, %v1048
      %v1052 = vsub.f32 %v1036, %v1050
      %v1053 = vmul.f32 %v434, %v1051
      %v1054 = vmul.f32 %v435, %v1052
      %v1055 = vsel %vm458, %v1053, 0.0
      %1056 = vadd.xlane.f32.xlu0 %v1055
      %v1057 = vpop.xlane.xlu0 %1056
      %v1058 = vsel %vm458, %v1054, 0.0
      %1059 = vadd.xlane.f32.xlu0 %v1058
      %v1060 = vpop.xlane.xlu0 %1059
      %v1061 = vsub.f32 0.0, %v1057
      %v1062 = vsub.f32 0.0, %v1060
      %v1063 = vmul.f32 %v440, %v1061
      %v1064 = vmul.f32 %v441, %v1062
      %v1065 = vsel %vm407, %v1063, 0.0
      %v1066 = vsel %vm407, %v1064, 0.0
      %v1067 = vadd.f32 %v1065, %v1066
      %1068 = vadd.xlane.f32.xlu0 %v1067
      %v1069 = vpop.xlane.xlu0 %1068
      %v1070 = vrot.slane %v1069, 4
      %v1071 = vadd.f32 %v1069, %v1070
      %v1072 = vrot.slane %v1071, 2
      %v1073 = vadd.f32 %v1071, %v1072
      %v1074 = vrot.slane %v1073, 1
      %v1075 = vadd.f32 %v1073, %v1074
      %s1076 = vtos %v1075
      %s1077 = smul.f32 %s1076, %s457
      %vm1078 = vcmp.eq.f32.partialorder %v1021, %v1031
      %vm1079 = vcmp.eq.f32.partialorder %v1026, %v1034
      %v1080 = vsel %vm1078, %v388, 4
      %v1081 = vsel %vm1079, %v388, 4
      %v1082 = vsel %vm458, %v1080, 2147483647
      %v1083 = vand.u32 %v1082, 65535
      %v1084 = vshra.s32 %v1082, 16
      %v1085 = vcvt.s32.f32 %v1083
      %v1086 = vcvt.s32.f32 %v1084
      %1087 = vmin.xlane.f32.xlu0 %v1086
      %v1088 = vpop.xlane.xlu0 %1087
      %vm1089 = vcmp.eq.f32.partialorder %v1086, %v1088
      %v1090 = vsel %vm1089, %v1085, inf
      %1091 = vmin.xlane.f32.xlu0 %v1090
      %v1092 = vpop.xlane.xlu0 %1091
      %v1093 = vcvt.f32.s32 %v1092
      %v1094 = vcvt.f32.s32 %v1088
      %v1095 = vshll.u32 %v1094, 16
      %v1096 = vadd.s32 %v1095, %v1093
      %v1097 = vsel %vm458, %v1081, 2147483647
      %v1098 = vand.u32 %v1097, 65535
      %v1099 = vshra.s32 %v1097, 16
      %v1100 = vcvt.s32.f32 %v1098
      %v1101 = vcvt.s32.f32 %v1099
      %1102 = vmin.xlane.f32.xlu0 %v1101
      %v1103 = vpop.xlane.xlu0 %1102
      %vm1104 = vcmp.eq.f32.partialorder %v1101, %v1103
      %v1105 = vsel %vm1104, %v1100, inf
      %1106 = vmin.xlane.f32.xlu0 %v1105
      %v1107 = vpop.xlane.xlu0 %1106
      %v1108 = vcvt.f32.s32 %v1107
      %v1109 = vcvt.f32.s32 %v1103
      %v1110 = vshll.u32 %v1109, 16
      %v1111 = vadd.s32 %v1110, %v1108
      %vm1112 = vcmp.eq.s32.totalorder %v1096, %v385
      %vm1113 = vcmp.eq.s32.totalorder %v1111, %v386
      %vm1114 = vmand %vm436, %vm1112
      %vm1115 = vmand %vm437, %vm1113
      %v1116 = vsel %vm1114, 1.0, 0.0
      %v1117 = vsel %vm1115, 1.0, 0.0
      %v1118 = vsel %vm407, %v1116, 0.0
      %v1119 = vsel %vm407, %v1117, 0.0
      %v1120 = vadd.f32 %v1118, %v1119
      %1121 = vadd.xlane.f32.xlu0 %v1120
      %v1122 = vpop.xlane.xlu0 %1121
      %v1123 = vrot.slane %v1122, 4
      %v1124 = vadd.f32 %v1122, %v1123
      %v1125 = vrot.slane %v1124, 2
      %v1126 = vadd.f32 %v1124, %v1125
      %v1127 = vrot.slane %v1126, 1
      %v1128 = vadd.f32 %v1126, %v1127
      %s1129 = vtos %v1128
      %s1130 = smul.f32 %s1129, %s457
      %vm1131 = vcmp.eq.s32.totalorder %v388, 0
      %vm1132 = vcmp.eq.s32.totalorder %v388, 1
      %vm1133 = vcmp.eq.s32.totalorder %v388, 2
      %v1134 = vstv %s1130
      %v1135 = vsel %vm1133, %v1134, 0.0
      %v1136 = vstv %s1077
      %v1137 = vsel %vm1132, %v1136, %v1135
      %v1138 = vstv %s799
      %v1139 = vsel %vm1131, %v1138, %v1137
      %1140 = vst [vmem:[%s373] sm:$0x1] %v1139
      %1141 = vst.msk [vmem:[%s378] sm:$0xff] %vm407, %v1096
      %1142 = vst.msk [vmem:[%s378 + $0x8] sm:$0xff] %vm407, %v1111
      %p1143 = scmp.lt.s32.totalorder %s19, 1
      %s1144 = scalar_select %p1143, %s19, 1
      %s1145 = scalar_lea.vmem %s6, %s1144
      %p1146 = scmp.lt.s32.totalorder %s19, 1
      %s1147 = scalar_select %p1146, %s19, 1
      %s1148 = smul.addr %s1147, 2
      %s1149 = smul.addr %s1148, 8
      %s1150 = scalar_lea.vmem %s7, %s1149
      // Predicated region
      $region45: #{_lambda_.1} parent=43 // pred_check
        %p1151 = pneg %p193
      $region46: #{_lambda_.1} parent=43 // pred_check_branch
        %1153 = sbr.rel (%p1151) target = $region48
      $region47: #{_lambda_.1} parent=43 // pred_region
        _
      $region48: #{_lambda_.1} parent=43 // pred_fallthru
        _
      // Predicated region
      $region49: #{_lambda_.1} parent=43 // pred_check
        %p1154 = pneg %p219
      $region50: #{_lambda_.1} parent=43 // pred_check_branch
        %1156 = sbr.rel (%p1154) target = $region52
      $region51: #{_lambda_.1} parent=43 // pred_region
        _
      $region52: #{_lambda_.1} parent=43 // pred_fallthru
        _
    $region44: #{_lambda_.1} parent=5 // pred_fallthru
      _
    %p1157 = scmp.le.s32.totalorder 2, %s14
    // Predicated region
    $region53: #{_lambda_.1} parent=5 // pred_check
      %p1158 = pneg %p1157
    $region54: #{_lambda_.1} parent=5 // pred_check_branch
      %1160 = sbr.rel (%p1158) target = $region56
    $region55: #{_lambda_.1} parent=5 // pred_region
      %s1161 = ssub.s32 %s14, 2
      // Predicated region
      $region57: #{_lambda_.1} parent=55 // pred_check
        %p1162 = pneg %p199
      $region58: #{_lambda_.1} parent=55 // pred_check_branch
        %1164 = sbr.rel (%p1162) target = $region60
      $region59: #{_lambda_.1} parent=55 // pred_region
        %p1165 = scmp.lt.s32.totalorder %s20, 1
        %s1166 = scalar_select %p1165, %s20, 1
        %s1167 = scalar_lea.vmem %s6, %s1166
      $region60: #{_lambda_.1} parent=55 // pred_fallthru
        _
      // Predicated region
      $region61: #{_lambda_.1} parent=55 // pred_check
        %p1168 = pneg %p225
      $region62: #{_lambda_.1} parent=55 // pred_check_branch
        %1170 = sbr.rel (%p1168) target = $region64
      $region63: #{_lambda_.1} parent=55 // pred_region
        %p1171 = scmp.lt.s32.totalorder %s20, 1
        %s1172 = scalar_select %p1171, %s20, 1
        %s1173 = smul.addr %s1172, 2
        %s1174 = smul.addr %s1173, 8
        %s1175 = scalar_lea.vmem %s7, %s1174
      $region64: #{_lambda_.1} parent=55 // pred_fallthru
        _
    $region56: #{_lambda_.1} parent=5 // pred_fallthru
      _
  $region6: #{_lambda_.1} parent=0 // loop_footer
    %s18 = sadd.s32 1, %s14
  $region7: #{_lambda_.1} parent=0 // loop_footer_branch
    %13 = sbr.rel target = $region3
  $region8: #{_lambda_.1} parent=0 // loop_exit
    _

</llo_original>
